<compile_context>
chip_gen: v5e
topology: v5e:2x2
jax: 0.10.0
libtpu: 0.0.40
codegen_flags: <defaults>
</compile_context>

<pallas_src>
import functools

import jax
import jax.numpy as jnp
from jax.experimental import pallas as pl
from jax.experimental.pallas import tpu as pltpu


def _round_up(n, m):
    return ((n + m - 1) // m) * m


def _generator_kernel(x_ref, w1_ref, b1_ref, w2_ref, b2_ref, w3_ref, b3_ref,
                      out_ref):
    # x arrives in its original dtype (typically f32) and is cast to bf16 on the
    # VPU; all matmuls run on the MXU with f32 accumulation.  Bias add / relu /
    # tanh stay in f32, final cast to the (bf16 by default) output dtype.
    x = x_ref[...].astype(jnp.bfloat16)

    h1 = jnp.dot(x, w1_ref[...], preferred_element_type=jnp.float32)
    h1 = jnp.maximum(h1 + b1_ref[...], 0.0)                          # relu(map1)

    h2 = jnp.dot(h1.astype(jnp.bfloat16), w2_ref[...],
                 preferred_element_type=jnp.float32)
    h2 = jnp.maximum(h2 + b2_ref[...], 0.0)                          # relu(map2)

    h3 = jnp.dot(h2.astype(jnp.bfloat16), w3_ref[...],
                 preferred_element_type=jnp.float32)
    out_ref[...] = jnp.tanh(h3 + b3_ref[...]).astype(out_ref.dtype)  # tanh(map3)


def prepare_generator_params(w1, b1, w2, b2, w3, b3):
    """One-time conversion to kernel layout.

    Casts weights to bf16, biases to f32, and pads the hidden / output feature
    dims to lane multiples (128).  Call ONCE and reuse the result for every
    forward pass -- this is what removes the per-call cast/pad HBM traffic.
    Returns (prepared_params, out_dim).
    """
    in_dim, hid = w1.shape
    out_dim = w3.shape[1]
    hid_p = _round_up(hid, 128)
    out_p = _round_up(out_dim, 128)

    bf16 = jnp.bfloat16
    w1p = jnp.pad(w1.astype(bf16), ((0, 0), (0, hid_p - hid)))
    w2p = jnp.pad(w2.astype(bf16), ((0, hid_p - hid), (0, hid_p - hid)))
    w3p = jnp.pad(w3.astype(bf16), ((0, hid_p - hid), (0, out_p - out_dim)))
    b1p = jnp.pad(b1.astype(jnp.float32), ((0, 0), (0, hid_p - hid)))
    b2p = jnp.pad(b2.astype(jnp.float32), ((0, 0), (0, hid_p - hid)))
    b3p = jnp.pad(b3.astype(jnp.float32), ((0, 0), (0, out_p - out_dim)))
    params = tuple(jax.device_put(p) for p in (w1p, b1p, w2p, b2p, w3p, b3p))
    return params, out_dim


@functools.partial(jax.jit, static_argnames=("out_dim", "block_b", "out_dtype"))
def generator_forward(x, w1p, b1p, w2p, b2p, w3p, b3p, *, out_dim,
                      block_b=None, out_dtype=jnp.bfloat16):
    """Fused generator forward.  Weights must come from prepare_generator_params."""
    B, in_dim = x.shape
    hid_p = w1p.shape[1]
    out_p = w3p.shape[1]

    # Batch tiling: one TensorCore per chip on v5e/v6e, so for B <= 1024 a
    # single grid step is fastest (no per-step overhead, full M fed to the MXU,
    # VMEM is nowhere near a limit).  Larger batches use 512-row tiles so the
    # x-load / compute / out-store pipeline has >= 2 stages to overlap.
    if block_b is None:
        block_b = B if B <= 1024 else 512

    if B % block_b != 0:
        B_p = _round_up(B, block_b)
        x_in = jnp.pad(x, ((0, B_p - B), (0, 0)))   # only in the multi-step case
    else:
        B_p = B
        x_in = x
    grid = (B_p // block_b,)

    # Weights/biases are fully resident and never re-fetched (constant index
    # map) -> a single buffer is enough.
    resident = pl.Buffered(1)
    in_specs = [
        # x keeps its true last dim (== full array dim, so legal even though
        # 784 is not a multiple of 128); masked input loads are cheap.
        pl.BlockSpec((block_b, in_dim), lambda i: (i, 0)),                        # x
        pl.BlockSpec((in_dim, hid_p), lambda i: (0, 0), pipeline_mode=resident),  # W1
        pl.BlockSpec((1, hid_p), lambda i: (0, 0), pipeline_mode=resident),       # b1
        pl.BlockSpec((hid_p, hid_p), lambda i: (0, 0), pipeline_mode=resident),   # W2
        pl.BlockSpec((1, hid_p), lambda i: (0, 0), pipeline_mode=resident),       # b2
        pl.BlockSpec((hid_p, out_p), lambda i: (0, 0), pipeline_mode=resident),   # W3
        pl.BlockSpec((1, out_p), lambda i: (0, 0), pipeline_mode=resident),       # b3
    ]
    # Output block is lane-dense (out_p is a multiple of 128) -> unmasked vst.
    out_specs = pl.BlockSpec((block_b, out_p), lambda i: (i, 0))

    # Advisory scheduler hint so XLA doesn't serialize this small custom call
    # poorly against surrounding ops.
    itemsize = lambda a: a.size * jnp.dtype(a.dtype).itemsize
    flops = 2 * B_p * (in_dim * hid_p + hid_p * hid_p + hid_p * out_p)
    transcendentals = B_p * out_p
    bytes_accessed = (itemsize(x_in)
                      + sum(itemsize(a) for a in (w1p, b1p, w2p, b2p, w3p, b3p))
                      + B_p * out_p * jnp.dtype(out_dtype).itemsize)

    out_padded = pl.pallas_call(
        _generator_kernel,
        out_shape=jax.ShapeDtypeStruct((B_p, out_p), out_dtype),
        grid_spec=pltpu.PrefetchScalarGridSpec(
            num_scalar_prefetch=0,
            grid=grid,
            in_specs=in_specs,
            out_specs=out_specs,
        ),
        compiler_params=pltpu.CompilerParams(
            dimension_semantics=("parallel",)),
        cost_estimate=pl.CostEstimate(
            flops=flops,
            transcendentals=transcendentals,
            bytes_accessed=bytes_accessed),
    )(x_in, w1p, b1p, w2p, b2p, w3p, b3p)

    return out_padded[:B, :out_dim]


def init_generator_params(key, input_size, hidden_size, output_size,
                          dtype=jnp.float32):
    """Deterministic init mimicking nn.Linear's U(-1/sqrt(fan_in), +1/sqrt(fan_in)).

    Weights are returned already transposed to (in, out) layout.
    """
    def linear(key, fan_in, fan_out):
        kw, kb = jax.random.split(key)
        bound = 1.0 / jnp.sqrt(jnp.asarray(fan_in, jnp.float32))
        w = jax.random.uniform(kw, (fan_in, fan_out), dtype, -bound, bound)
        b = jax.random.uniform(kb, (1, fan_out), dtype, -bound, bound)
        return w, b

    k1, k2, k3 = jax.random.split(key, 3)
    w1, b1 = linear(k1, input_size, hidden_size)
    w2, b2 = linear(k2, hidden_size, hidden_size)
    w3, b3 = linear(k3, hidden_size, output_size)
    return w1, b1, w2, b2, w3, b3


def generator_ref(x, w1, b1, w2, b2, w3, b3):
    """Pure-JAX f32 reference matching the PyTorch forward."""
    h = jnp.maximum(x @ w1 + b1, 0.0)
    h = jnp.maximum(h @ w2 + b2, 0.0)
    return jnp.tanh(h @ w3 + b3)


if __name__ == "__main__":
    # Module constants (MNIST generator): input_size=784, hidden_size=256,
    # output_size=input_size.  Small batch for the smoke test.
    input_size = 784
    hidden_size = 256
    output_size = input_size
    batch = 64

    key = jax.random.PRNGKey(0)
    kx, kp = jax.random.split(key)

    x = jax.random.normal(kx, (batch, input_size), dtype=jnp.float32)
    raw_params = init_generator_params(kp, input_size, hidden_size, output_size)

    # One-time weight preparation (cast to bf16 + lane padding); reused forever.
    prepared, out_dim = prepare_generator_params(*raw_params)

    out = jax.block_until_ready(generator_forward(x, *prepared, out_dim=out_dim))
    ref = generator_ref(x, *raw_params)

    assert out.shape == (batch, output_size), out.shape
    assert out.dtype == jnp.bfloat16, out.dtype  # bf16 output by design (perf review)
    # bf16 MXU inputs (f32 accumulation) + bf16 output vs. f32 reference:
    # loosened tolerance is an intentional precision trade (fine for a GAN).
    max_err = float(jnp.max(jnp.abs(out.astype(jnp.float32) - ref)))
    assert max_err < 5e-2, max_err

    print("KERNEL_OK")
</pallas_src>

<mosaic_0001>
module attributes {stable_mosaic.version = 11 : i64} {
  func.func @_generator_kernel(%arg0: i32, %arg1: memref<64x784xf32, #tpu.memory_space<vmem>>, %arg2: memref<784x256xbf16, #tpu.memory_space<vmem>>, %arg3: memref<1x256xf32, #tpu.memory_space<vmem>>, %arg4: memref<256x256xbf16, #tpu.memory_space<vmem>>, %arg5: memref<1x256xf32, #tpu.memory_space<vmem>>, %arg6: memref<256x896xbf16, #tpu.memory_space<vmem>>, %arg7: memref<1x896xf32, #tpu.memory_space<vmem>>, %arg8: memref<64x896xbf16, #tpu.memory_space<vmem>>) attributes {dimension_semantics = [#tpu.dimension_semantics<parallel>], iteration_bounds = array<i64: 1>, scalar_prefetch = 0 : i64, scratch_operands = 0 : i64, tpu.core_type = #tpu.core_type<tc>, window_params = [{transform_indices = @transform_0, window_bounds = array<i64: 64, 784>}, {pipeline_mode = #tpu.pipeline_mode<synchronous>, transform_indices = @transform_1, window_bounds = array<i64: 784, 256>}, {pipeline_mode = #tpu.pipeline_mode<synchronous>, transform_indices = @transform_2, window_bounds = array<i64: 1, 256>}, {pipeline_mode = #tpu.pipeline_mode<synchronous>, transform_indices = @transform_3, window_bounds = array<i64: 256, 256>}, {pipeline_mode = #tpu.pipeline_mode<synchronous>, transform_indices = @transform_4, window_bounds = array<i64: 1, 256>}, {pipeline_mode = #tpu.pipeline_mode<synchronous>, transform_indices = @transform_5, window_bounds = array<i64: 256, 896>}, {pipeline_mode = #tpu.pipeline_mode<synchronous>, transform_indices = @transform_6, window_bounds = array<i64: 1, 896>}, {transform_indices = @transform_7, window_bounds = array<i64: 64, 896>}]} {
    %c0 = arith.constant 0 : index
    %c0_0 = arith.constant 0 : index
    %0 = vector.load %arg1[%c0, %c0_0] : memref<64x784xf32, #tpu.memory_space<vmem>>, vector<64x784xf32>
    %1 = arith.truncf %0 : vector<64x784xf32> to vector<64x784xbf16>
    %c0_1 = arith.constant 0 : index
    %c0_2 = arith.constant 0 : index
    %2 = vector.load %arg2[%c0_1, %c0_2] : memref<784x256xbf16, #tpu.memory_space<vmem>>, vector<784x256xbf16>
    %cst = arith.constant dense<0.000000e+00> : vector<64x256xf32>
    %3 = tpu.matmul %1, %2, %cst {dimension_numbers = #tpu.dot_dimension_numbers<[1], [0], [0], [1], [0, 0, 1, 1], [], []>} : vector<64x784xbf16>, vector<784x256xbf16>, vector<64x256xf32> -> vector<64x256xf32>
    %c0_3 = arith.constant 0 : index
    %c0_4 = arith.constant 0 : index
    %4 = vector.load %arg3[%c0_3, %c0_4] : memref<1x256xf32, #tpu.memory_space<vmem>>, vector<1x256xf32>
    %5 = vector.broadcast %4 : vector<1x256xf32> to vector<64x256xf32>
    %6 = arith.addf %3, %5 : vector<64x256xf32>
    %cst_5 = arith.constant 0.000000e+00 : f32
    %7 = vector.broadcast %cst_5 : f32 to vector<64x256xf32>
    %8 = arith.maximumf %6, %7 : vector<64x256xf32>
    %9 = arith.truncf %8 : vector<64x256xf32> to vector<64x256xbf16>
    %c0_6 = arith.constant 0 : index
    %c0_7 = arith.constant 0 : index
    %10 = vector.load %arg4[%c0_6, %c0_7] : memref<256x256xbf16, #tpu.memory_space<vmem>>, vector<256x256xbf16>
    %cst_8 = arith.constant dense<0.000000e+00> : vector<64x256xf32>
    %11 = tpu.matmul %9, %10, %cst_8 {dimension_numbers = #tpu.dot_dimension_numbers<[1], [0], [0], [1], [0, 0, 1, 1], [], []>} : vector<64x256xbf16>, vector<256x256xbf16>, vector<64x256xf32> -> vector<64x256xf32>
    %c0_9 = arith.constant 0 : index
    %c0_10 = arith.constant 0 : index
    %12 = vector.load %arg5[%c0_9, %c0_10] : memref<1x256xf32, #tpu.memory_space<vmem>>, vector<1x256xf32>
    %13 = vector.broadcast %12 : vector<1x256xf32> to vector<64x256xf32>
    %14 = arith.addf %11, %13 : vector<64x256xf32>
    %cst_11 = arith.constant 0.000000e+00 : f32
    %15 = vector.broadcast %cst_11 : f32 to vector<64x256xf32>
    %16 = arith.maximumf %14, %15 : vector<64x256xf32>
    %17 = arith.truncf %16 : vector<64x256xf32> to vector<64x256xbf16>
    %c0_12 = arith.constant 0 : index
    %c0_13 = arith.constant 0 : index
    %18 = vector.load %arg6[%c0_12, %c0_13] : memref<256x896xbf16, #tpu.memory_space<vmem>>, vector<256x896xbf16>
    %cst_14 = arith.constant dense<0.000000e+00> : vector<64x896xf32>
    %19 = tpu.matmul %17, %18, %cst_14 {dimension_numbers = #tpu.dot_dimension_numbers<[1], [0], [0], [1], [0, 0, 1, 1], [], []>} : vector<64x256xbf16>, vector<256x896xbf16>, vector<64x896xf32> -> vector<64x896xf32>
    %c0_15 = arith.constant 0 : index
    %c0_16 = arith.constant 0 : index
    %20 = vector.load %arg7[%c0_15, %c0_16] : memref<1x896xf32, #tpu.memory_space<vmem>>, vector<1x896xf32>
    %21 = vector.broadcast %20 : vector<1x896xf32> to vector<64x896xf32>
    %22 = arith.addf %19, %21 : vector<64x896xf32>
    %23 = math.tanh %22 : vector<64x896xf32>
    %24 = arith.truncf %23 : vector<64x896xf32> to vector<64x896xbf16>
    %c0_17 = arith.constant 0 : index
    %c0_18 = arith.constant 0 : index
    %25 = vector.load %arg8[%c0_17, %c0_18] : memref<64x896xbf16, #tpu.memory_space<vmem>>, vector<64x896xbf16>
    tpu.vector_store %arg8[%c0_17, %c0_18], %24 {strides = array<i32>} : memref<64x896xbf16, #tpu.memory_space<vmem>>, vector<64x896xbf16>,
    return
  }
  func.func @transform_0(%arg0: i32) -> (i32, i32) {
    %c0_i32 = arith.constant 0 : i32
    %c0_i32_0 = arith.constant 0 : i32
    return %arg0, %c0_i32 : i32, i32
  }
  func.func @transform_1(%arg0: i32) -> (i32, i32) {
    %c0_i32 = arith.constant 0 : i32
    %c0_i32_0 = arith.constant 0 : i32
    %c0_i32_1 = arith.constant 0 : i32
    return %c0_i32, %c0_i32_0 : i32, i32
  }
  func.func @transform_2(%arg0: i32) -> (i32, i32) {
    %c0_i32 = arith.constant 0 : i32
    %c0_i32_0 = arith.constant 0 : i32
    %c0_i32_1 = arith.constant 0 : i32
    return %c0_i32, %c0_i32_0 : i32, i32
  }
  func.func @transform_3(%arg0: i32) -> (i32, i32) {
    %c0_i32 = arith.constant 0 : i32
    %c0_i32_0 = arith.constant 0 : i32
    %c0_i32_1 = arith.constant 0 : i32
    return %c0_i32, %c0_i32_0 : i32, i32
  }
  func.func @transform_4(%arg0: i32) -> (i32, i32) {
    %c0_i32 = arith.constant 0 : i32
    %c0_i32_0 = arith.constant 0 : i32
    %c0_i32_1 = arith.constant 0 : i32
    return %c0_i32, %c0_i32_0 : i32, i32
  }
  func.func @transform_5(%arg0: i32) -> (i32, i32) {
    %c0_i32 = arith.constant 0 : i32
    %c0_i32_0 = arith.constant 0 : i32
    %c0_i32_1 = arith.constant 0 : i32
    return %c0_i32, %c0_i32_0 : i32, i32
  }
  func.func @transform_6(%arg0: i32) -> (i32, i32) {
    %c0_i32 = arith.constant 0 : i32
    %c0_i32_0 = arith.constant 0 : i32
    %c0_i32_1 = arith.constant 0 : i32
    return %c0_i32, %c0_i32_0 : i32, i32
  }
  func.func @transform_7(%arg0: i32) -> (i32, i32) {
    %c0_i32 = arith.constant 0 : i32
    %c0_i32_0 = arith.constant 0 : i32
    return %arg0, %c0_i32 : i32, i32
  }
}

</mosaic_0001>

<llo_original>
// kernel: generator_forward.1
$region0: #{generator_forward.1}
  #allocation0 [shape = 'u32[]', space=smem, size = 0x4, offset = 0x4, fixed_abs, tag = 'smem constant byte address 0x4 - core index']
  #allocation1 [shape = 'u32[72,128]{1,0:T(1,128)}', space=vmem, size = 0x9000, scoped, tag = 'internal scratch']
  %s0 = inlined_call_operand.hbm [shape: f32[64,784], index: 0, kind: input, shape index: {}]
  %s1 = inlined_call_operand.hbm [shape: bf16[784,256], index: 1, kind: input, shape index: {}]
  %s2 = inlined_call_operand.hbm [shape: f32[1,256], index: 2, kind: input, shape index: {}]
  %s3 = inlined_call_operand.hbm [shape: bf16[256,256], index: 3, kind: input, shape index: {}]
  %s4 = inlined_call_operand.vmem [shape: f32[1,256], index: 4, kind: input, shape index: {}]
  %s5 = inlined_call_operand.hbm [shape: bf16[256,896], index: 5, kind: input, shape index: {}]
  %s6 = inlined_call_operand.hbm [shape: f32[1,896], index: 6, kind: input, shape index: {}]
  %s7 = inlined_call_operand.hbm [shape: bf16[64,896], index: 7, kind: output, shape index: {}]
  %s8 = sld [smem:[#allocation0]]
  $region62: #{generator_forward.1} parent=0
    _
  %s10 = ssub.s32 1, %s8
  %s11 = scalar_select 0, %s10, %s8
  $region1: #{generator_forward.1} parent=0
    #allocation2 [shape = 'u8[229376]{0}', space=vmem, size = 0x38000, scoped, tag = 'input window, operand 0, single buffered']
    #allocation3 [shape = 's32[1]{0}', space=sflag, size = 0x4, scoped, tag = 'scoped memory for generator_forward.1']
    #allocation4 [shape = 's32[1]{0}', space=sflag, size = 0x4, scoped, tag = 'scoped memory for generator_forward.1']
    #allocation5 [shape = 'u8[401408]{0}', space=vmem, size = 0x62000, scoped, tag = 'input window, operand 1, single buffered']
    #allocation6 [shape = 's32[1]{0}', space=sflag, size = 0x4, scoped, tag = 'scoped memory for generator_forward.1']
    #allocation7 [shape = 'u8[1024]{0}', space=vmem, size = 0x400, scoped, tag = 'input window, operand 2, single buffered']
    #allocation8 [shape = 'u8[131072]{0}', space=vmem, size = 0x20000, scoped, tag = 'input window, operand 3, single buffered']
    #allocation9 [shape = 's32[1]{0}', space=sflag, size = 0x4, scoped, tag = 'scoped memory for generator_forward.1']
    #allocation10 [shape = 'u8[458752]{0}', space=vmem, size = 0x70000, scoped, tag = 'input window, operand 5, single buffered']
    #allocation11 [shape = 'u8[3584]{0}', space=vmem, size = 0x1000, scoped, tag = 'input window, operand 6, single buffered']
    #allocation12 [shape = 's32[1]{0}', space=sflag, size = 0x4, scoped, tag = 'scoped memory for generator_forward.1']
    #allocation13 [shape = 'u8[114688]{0}', space=vmem, size = 0x1c000, scoped, tag = 'output window, operand 0, single buffered']
    %12 = vsyncpa [#allocation3], 0
    %13 = vsyncpa [#allocation6], 0
    %14 = vsyncpa [#allocation9], 0
    %15 = vsyncpa [#allocation12], 0
    %16 = vsyncpa [#allocation4], 0
    // Predicated region
    $region2: #{generator_forward.1} parent=1 // pred_check
      _
    $region3: #{generator_forward.1} parent=1 // pred_check_branch
      %18 = sbr.rel (0) target = $region5
    $region4: #{generator_forward.1} parent=1 // pred_region
      %20 = vsyncadd [#allocation3], 0
      %s21 = sshll.u32 %s0, 4
      %s22 = int_to_ptr.hbm [resolvable:$true] %s21
      %s23 = sshll.u32 [#allocation2], 4
      %s24 = int_to_ptr.vmem [resolvable:$true] %s23
      %29 = dma.hbm_to_vmem [thread:$0]  %s22, 7168, %s24, [#allocation3], 896, 896, 56
    $region5: #{generator_forward.1} parent=1 // pred_fallthru
      _
    // Predicated region
    $region6: #{generator_forward.1} parent=1 // pred_check
      _
    $region7: #{generator_forward.1} parent=1 // pred_check_branch
      %31 = sbr.rel (0) target = $region9
    $region8: #{generator_forward.1} parent=1 // pred_region
      %33 = vsyncadd [#allocation6], 0
      %s34 = sshll.u32 %s1, 4
      %s35 = int_to_ptr.hbm [resolvable:$true] %s34
      %s36 = sshll.u32 [#allocation5], 4
      %s37 = int_to_ptr.vmem [resolvable:$true] %s36
      %42 = dma.hbm_to_vmem [thread:$0]  %s35, 12544, %s37, [#allocation6], 128, 128, 8
    $region9: #{generator_forward.1} parent=1 // pred_fallthru
      _
    // Predicated region
    $region10: #{generator_forward.1} parent=1 // pred_check
      _
    $region11: #{generator_forward.1} parent=1 // pred_check_branch
      %44 = sbr.rel (0) target = $region13
    $region12: #{generator_forward.1} parent=1 // pred_region
      %46 = vsyncadd [#allocation6], 0
      %s48 = sshll.u32 %s2, 4
      %s49 = int_to_ptr.hbm [resolvable:$true] %s48
      %s50 = sshll.u32 [#allocation7], 4
      %s51 = int_to_ptr.vmem [resolvable:$true] %s50
      %53 = dma.hbm_to_vmem [thread:$0]  %s49, 32, %s51, [#allocation6]
    $region13: #{generator_forward.1} parent=1 // pred_fallthru
      _
    // Predicated region
    $region14: #{generator_forward.1} parent=1 // pred_check
      _
    $region15: #{generator_forward.1} parent=1 // pred_check_branch
      %55 = sbr.rel (0) target = $region17
    $region16: #{generator_forward.1} parent=1 // pred_region
      %57 = vsyncadd [#allocation9], 0
      %s58 = sshll.u32 %s3, 4
      %s59 = int_to_ptr.hbm [resolvable:$true] %s58
      %s60 = sshll.u32 [#allocation8], 4
      %s61 = int_to_ptr.vmem [resolvable:$true] %s60
      %66 = dma.hbm_to_vmem [thread:$0]  %s59, 4096, %s61, [#allocation9], 128, 128, 8
    $region17: #{generator_forward.1} parent=1 // pred_fallthru
      _
    // Predicated region
    $region18: #{generator_forward.1} parent=1 // pred_check
      _
    $region19: #{generator_forward.1} parent=1 // pred_check_branch
      %68 = sbr.rel (0) target = $region21
    $region20: #{generator_forward.1} parent=1 // pred_region
      _
    $region21: #{generator_forward.1} parent=1 // pred_fallthru
      _
    // Predicated region
    $region22: #{generator_forward.1} parent=1 // pred_check
      _
    $region23: #{generator_forward.1} parent=1 // pred_check_branch
      %70 = sbr.rel (0) target = $region25
    $region24: #{generator_forward.1} parent=1 // pred_region
      %72 = vsyncadd [#allocation9], 0
      %s73 = sshll.u32 %s5, 4
      %s74 = int_to_ptr.hbm [resolvable:$true] %s73
      %s75 = sshll.u32 [#allocation10], 4
      %s76 = int_to_ptr.vmem [resolvable:$true] %s75
      %81 = dma.hbm_to_vmem [thread:$0]  %s74, 14336, %s76, [#allocation9], 448, 448, 28
    $region25: #{generator_forward.1} parent=1 // pred_fallthru
      _
    // Predicated region
    $region26: #{generator_forward.1} parent=1 // pred_check
      _
    $region27: #{generator_forward.1} parent=1 // pred_check_branch
      %83 = sbr.rel (0) target = $region29
    $region28: #{generator_forward.1} parent=1 // pred_region
      %85 = vsyncadd [#allocation12], 0
      %s87 = sshll.u32 %s6, 4
      %s88 = int_to_ptr.hbm [resolvable:$true] %s87
      %s89 = sshll.u32 [#allocation11], 4
      %s90 = int_to_ptr.vmem [resolvable:$true] %s89
      %92 = dma.hbm_to_vmem [thread:$0]  %s88, 112, %s90, [#allocation12]
    $region29: #{generator_forward.1} parent=1 // pred_fallthru
      _
    // Predicated region
    $region30: #{generator_forward.1} parent=1 // pred_check
      _
    $region31: #{generator_forward.1} parent=1 // pred_check_branch
      %94 = sbr.rel (0) target = $region33
    $region32: #{generator_forward.1} parent=1 // pred_region
      %96 = dma.done [#allocation3], 7168
    $region33: #{generator_forward.1} parent=1 // pred_fallthru
      _
    // Predicated region
    $region34: #{generator_forward.1} parent=1 // pred_check
      _
    $region35: #{generator_forward.1} parent=1 // pred_check_branch
      %98 = sbr.rel (0) target = $region37
    $region36: #{generator_forward.1} parent=1 // pred_region
      %100 = dma.done [#allocation6], 12544
    $region37: #{generator_forward.1} parent=1 // pred_fallthru
      _
    // Predicated region
    $region38: #{generator_forward.1} parent=1 // pred_check
      _
    $region39: #{generator_forward.1} parent=1 // pred_check_branch
      %102 = sbr.rel (0) target = $region41
    $region40: #{generator_forward.1} parent=1 // pred_region
      %104 = dma.done [#allocation6], 32
    $region41: #{generator_forward.1} parent=1 // pred_fallthru
      _
    // Predicated region
    $region42: #{generator_forward.1} parent=1 // pred_check
      _
    $region43: #{generator_forward.1} parent=1 // pred_check_branch
      %106 = sbr.rel (0) target = $region45
    $region44: #{generator_forward.1} parent=1 // pred_region
      %108 = dma.done [#allocation9], 4096
    $region45: #{generator_forward.1} parent=1 // pred_fallthru
      _
    // Predicated region
    $region46: #{generator_forward.1} parent=1 // pred_check
      _
    $region47: #{generator_forward.1} parent=1 // pred_check_branch
      %110 = sbr.rel (0) target = $region49
    $region48: #{generator_forward.1} parent=1 // pred_region
      %112 = dma.done [#allocation9], 14336
    $region49: #{generator_forward.1} parent=1 // pred_fallthru
      _
    // Predicated region
    $region50: #{generator_forward.1} parent=1 // pred_check
      _
    $region51: #{generator_forward.1} parent=1 // pred_check_branch
      %114 = sbr.rel (0) target = $region53
    $region52: #{generator_forward.1} parent=1 // pred_region
      %116 = dma.done [#allocation12], 112
    $region53: #{generator_forward.1} parent=1 // pred_fallthru
      _
    %v118 = vld [vmem:[#allocation2] sm:$0xff]
    %v119 = vld [vmem:[#allocation2 + $0x8] sm:$0xff]
    %v120 = vld [vmem:[#allocation2 + $0x10] sm:$0xff]
    %v121 = vld [vmem:[#allocation2 + $0x18] sm:$0xff]
    %v122 = vld [vmem:[#allocation2 + $0x20] sm:$0xff]
    %v123 = vld [vmem:[#allocation2 + $0x28] sm:$0xff]
    %v124 = vld [vmem:[#allocation2 + $0x30] sm:$0xff]
    %v125 = vld [vmem:[#allocation2 + $0x38] sm:$0xff]
    %v126 = vld [vmem:[#allocation2 + $0x40] sm:$0xff]
    %v127 = vld [vmem:[#allocation2 + $0x48] sm:$0xff]
    %v128 = vld [vmem:[#allocation2 + $0x50] sm:$0xff]
    %v129 = vld [vmem:[#allocation2 + $0x58] sm:$0xff]
    %v130 = vld [vmem:[#allocation2 + $0x60] sm:$0xff]
    %v131 = vld [vmem:[#allocation2 + $0x68] sm:$0xff]
    %v132 = vld [vmem:[#allocation2 + $0x70] sm:$0xff]
    %v133 = vld [vmem:[#allocation2 + $0x78] sm:$0xff]
    %v134 = vld [vmem:[#allocation2 + $0x80] sm:$0xff]
    %v135 = vld [vmem:[#allocation2 + $0x88] sm:$0xff]
    %v136 = vld [vmem:[#allocation2 + $0x90] sm:$0xff]
    %v137 = vld [vmem:[#allocation2 + $0x98] sm:$0xff]
    %v138 = vld [vmem:[#allocation2 + $0xa0] sm:$0xff]
    %v139 = vld [vmem:[#allocation2 + $0xa8] sm:$0xff]
    %v140 = vld [vmem:[#allocation2 + $0xb0] sm:$0xff]
    %v141 = vld [vmem:[#allocation2 + $0xb8] sm:$0xff]
    %v142 = vld [vmem:[#allocation2 + $0xc0] sm:$0xff]
    %v143 = vld [vmem:[#allocation2 + $0xc8] sm:$0xff]
    %v144 = vld [vmem:[#allocation2 + $0xd0] sm:$0xff]
    %v145 = vld [vmem:[#allocation2 + $0xd8] sm:$0xff]
    %v146 = vld [vmem:[#allocation2 + $0xe0] sm:$0xff]
    %v147 = vld [vmem:[#allocation2 + $0xe8] sm:$0xff]
    %v148 = vld [vmem:[#allocation2 + $0xf0] sm:$0xff]
    %v149 = vld [vmem:[#allocation2 + $0xf8] sm:$0xff]
    %v150 = vld [vmem:[#allocation2 + $0x100] sm:$0xff]
    %v151 = vld [vmem:[#allocation2 + $0x108] sm:$0xff]
    %v152 = vld [vmem:[#allocation2 + $0x110] sm:$0xff]
    %v153 = vld [vmem:[#allocation2 + $0x118] sm:$0xff]
    %v154 = vld [vmem:[#allocation2 + $0x120] sm:$0xff]
    %v155 = vld [vmem:[#allocation2 + $0x128] sm:$0xff]
    %v156 = vld [vmem:[#allocation2 + $0x130] sm:$0xff]
    %v157 = vld [vmem:[#allocation2 + $0x138] sm:$0xff]
    %v158 = vld [vmem:[#allocation2 + $0x140] sm:$0xff]
    %v159 = vld [vmem:[#allocation2 + $0x148] sm:$0xff]
    %v160 = vld [vmem:[#allocation2 + $0x150] sm:$0xff]
    %v161 = vld [vmem:[#allocation2 + $0x158] sm:$0xff]
    %v162 = vld [vmem:[#allocation2 + $0x160] sm:$0xff]
    %v163 = vld [vmem:[#allocation2 + $0x168] sm:$0xff]
    %v164 = vld [vmem:[#allocation2 + $0x170] sm:$0xff]
    %v165 = vld [vmem:[#allocation2 + $0x178] sm:$0xff]
    %v166 = vld [vmem:[#allocation2 + $0x180] sm:$0xff]
    %v167 = vld [vmem:[#allocation2 + $0x188] sm:$0xff]
    %v168 = vld [vmem:[#allocation2 + $0x190] sm:$0xff]
    %v169 = vld [vmem:[#allocation2 + $0x198] sm:$0xff]
    %v170 = vld [vmem:[#allocation2 + $0x1a0] sm:$0xff]
    %v171 = vld [vmem:[#allocation2 + $0x1a8] sm:$0xff]
    %v172 = vld [vmem:[#allocation2 + $0x1b0] sm:$0xff]
    %v173 = vld [vmem:[#allocation2 + $0x1b8] sm:$0xff]
    %v174 = vpack.c.bf16 %v125, %v118
    %v175 = vpack.c.bf16 %v126, %v119
    %v176 = vpack.c.bf16 %v127, %v120
    %v177 = vpack.c.bf16 %v128, %v121
    %v178 = vpack.c.bf16 %v129, %v122
    %v179 = vpack.c.bf16 %v130, %v123
    %v180 = vpack.c.bf16 %v131, %v124
    %v181 = vpack.c.bf16 %v139, %v132
    %v182 = vpack.c.bf16 %v140, %v133
    %v183 = vpack.c.bf16 %v141, %v134
    %v184 = vpack.c.bf16 %v142, %v135
    %v185 = vpack.c.bf16 %v143, %v136
    %v186 = vpack.c.bf16 %v144, %v137
    %v187 = vpack.c.bf16 %v145, %v138
    %v188 = vpack.c.bf16 %v153, %v146
    %v189 = vpack.c.bf16 %v154, %v147
    %v190 = vpack.c.bf16 %v155, %v148
    %v191 = vpack.c.bf16 %v156, %v149
    %v192 = vpack.c.bf16 %v157, %v150
    %v193 = vpack.c.bf16 %v158, %v151
    %v194 = vpack.c.bf16 %v159, %v152
    %v195 = vpack.c.bf16 %v167, %v160
    %v196 = vpack.c.bf16 %v168, %v161
    %v197 = vpack.c.bf16 %v169, %v162
    %v198 = vpack.c.bf16 %v170, %v163
    %v199 = vpack.c.bf16 %v171, %v164
    %v200 = vpack.c.bf16 %v172, %v165
    %v201 = vpack.c.bf16 %v173, %v166
    %v202 = vld [vmem:[#allocation5] sm:$0xff]
    %v203 = vld [vmem:[#allocation5 + $0x8] sm:$0xff]
    %v204 = vld [vmem:[#allocation5 + $0x10] sm:$0xff]
    %v205 = vld [vmem:[#allocation5 + $0x18] sm:$0xff]
    %v206 = vld [vmem:[#allocation5 + $0x20] sm:$0xff]
    %v207 = vld [vmem:[#allocation5 + $0x28] sm:$0xff]
    %v208 = vld [vmem:[#allocation5 + $0x30] sm:$0xff]
    %v209 = vld [vmem:[#allocation5 + $0x38] sm:$0xff]
    %v210 = vld [vmem:[#allocation5 + $0x40] sm:$0xff]
    %v211 = vld [vmem:[#allocation5 + $0x48] sm:$0xff]
    %v212 = vld [vmem:[#allocation5 + $0x50] sm:$0xff]
    %v213 = vld [vmem:[#allocation5 + $0x58] sm:$0xff]
    %v214 = vld [vmem:[#allocation5 + $0x60] sm:$0xff]
    %v215 = vld [vmem:[#allocation5 + $0x68] sm:$0xff]
    %v216 = vld [vmem:[#allocation5 + $0x70] sm:$0xff]
    %v217 = vld [vmem:[#allocation5 + $0x78] sm:$0xff]
    %v218 = vld [vmem:[#allocation5 + $0x80] sm:$0xff]
    %v219 = vld [vmem:[#allocation5 + $0x88] sm:$0xff]
    %v220 = vld [vmem:[#allocation5 + $0x90] sm:$0xff]
    %v221 = vld [vmem:[#allocation5 + $0x98] sm:$0xff]
    %v222 = vld [vmem:[#allocation5 + $0xa0] sm:$0xff]
    %v223 = vld [vmem:[#allocation5 + $0xa8] sm:$0xff]
    %v224 = vld [vmem:[#allocation5 + $0xb0] sm:$0xff]
    %v225 = vld [vmem:[#allocation5 + $0xb8] sm:$0xff]
    %v226 = vld [vmem:[#allocation5 + $0xc0] sm:$0xff]
    %v227 = vld [vmem:[#allocation5 + $0xc8] sm:$0xff]
    %v228 = vld [vmem:[#allocation5 + $0xd0] sm:$0xff]
    %v229 = vld [vmem:[#allocation5 + $0xd8] sm:$0xff]
    %v230 = vld [vmem:[#allocation5 + $0xe0] sm:$0xff]
    %v231 = vld [vmem:[#allocation5 + $0xe8] sm:$0xff]
    %v232 = vld [vmem:[#allocation5 + $0xf0] sm:$0xff]
    %v233 = vld [vmem:[#allocation5 + $0xf8] sm:$0xff]
    %v234 = vld [vmem:[#allocation5 + $0x100] sm:$0xff]
    %v235 = vld [vmem:[#allocation5 + $0x108] sm:$0xff]
    %v236 = vld [vmem:[#allocation5 + $0x110] sm:$0xff]
    %v237 = vld [vmem:[#allocation5 + $0x118] sm:$0xff]
    %v238 = vld [vmem:[#allocation5 + $0x120] sm:$0xff]
    %v239 = vld [vmem:[#allocation5 + $0x128] sm:$0xff]
    %v240 = vld [vmem:[#allocation5 + $0x130] sm:$0xff]
    %v241 = vld [vmem:[#allocation5 + $0x138] sm:$0xff]
    %v242 = vld [vmem:[#allocation5 + $0x140] sm:$0xff]
    %v243 = vld [vmem:[#allocation5 + $0x148] sm:$0xff]
    %v244 = vld [vmem:[#allocation5 + $0x150] sm:$0xff]
    %v245 = vld [vmem:[#allocation5 + $0x158] sm:$0xff]
    %v246 = vld [vmem:[#allocation5 + $0x160] sm:$0xff]
    %v247 = vld [vmem:[#allocation5 + $0x168] sm:$0xff]
    %v248 = vld [vmem:[#allocation5 + $0x170] sm:$0xff]
    %v249 = vld [vmem:[#allocation5 + $0x178] sm:$0xff]
    %v250 = vld [vmem:[#allocation5 + $0x180] sm:$0xff]
    %v251 = vld [vmem:[#allocation5 + $0x188] sm:$0xff]
    %v252 = vld [vmem:[#allocation5 + $0x190] sm:$0xff]
    %v253 = vld [vmem:[#allocation5 + $0x198] sm:$0xff]
    %v254 = vld [vmem:[#allocation5 + $0x1a0] sm:$0xff]
    %v255 = vld [vmem:[#allocation5 + $0x1a8] sm:$0xff]
    %v256 = vld [vmem:[#allocation5 + $0x1b0] sm:$0xff]
    %v257 = vld [vmem:[#allocation5 + $0x1b8] sm:$0xff]
    %v258 = vld [vmem:[#allocation5 + $0x1c0] sm:$0xff]
    %v259 = vld [vmem:[#allocation5 + $0x1c8] sm:$0xff]
    %v260 = vld [vmem:[#allocation5 + $0x1d0] sm:$0xff]
    %v261 = vld [vmem:[#allocation5 + $0x1d8] sm:$0xff]
    %v262 = vld [vmem:[#allocation5 + $0x1e0] sm:$0xff]
    %v263 = vld [vmem:[#allocation5 + $0x1e8] sm:$0xff]
    %v264 = vld [vmem:[#allocation5 + $0x1f0] sm:$0xff]
    %v265 = vld [vmem:[#allocation5 + $0x1f8] sm:$0xff]
    %v266 = vld [vmem:[#allocation5 + $0x200] sm:$0xff]
    %v267 = vld [vmem:[#allocation5 + $0x208] sm:$0xff]
    %v268 = vld [vmem:[#allocation5 + $0x210] sm:$0xff]
    %v269 = vld [vmem:[#allocation5 + $0x218] sm:$0xff]
    %v270 = vld [vmem:[#allocation5 + $0x220] sm:$0xff]
    %v271 = vld [vmem:[#allocation5 + $0x228] sm:$0xff]
    %v272 = vld [vmem:[#allocation5 + $0x230] sm:$0xff]
    %v273 = vld [vmem:[#allocation5 + $0x238] sm:$0xff]
    %v274 = vld [vmem:[#allocation5 + $0x240] sm:$0xff]
    %v275 = vld [vmem:[#allocation5 + $0x248] sm:$0xff]
    %v276 = vld [vmem:[#allocation5 + $0x250] sm:$0xff]
    %v277 = vld [vmem:[#allocation5 + $0x258] sm:$0xff]
    %v278 = vld [vmem:[#allocation5 + $0x260] sm:$0xff]
    %v279 = vld [vmem:[#allocation5 + $0x268] sm:$0xff]
    %v280 = vld [vmem:[#allocation5 + $0x270] sm:$0xff]
    %v281 = vld [vmem:[#allocation5 + $0x278] sm:$0xff]
    %v282 = vld [vmem:[#allocation5 + $0x280] sm:$0xff]
    %v283 = vld [vmem:[#allocation5 + $0x288] sm:$0xff]
    %v284 = vld [vmem:[#allocation5 + $0x290] sm:$0xff]
    %v285 = vld [vmem:[#allocation5 + $0x298] sm:$0xff]
    %v286 = vld [vmem:[#allocation5 + $0x2a0] sm:$0xff]
    %v287 = vld [vmem:[#allocation5 + $0x2a8] sm:$0xff]
    %v288 = vld [vmem:[#allocation5 + $0x2b0] sm:$0xff]
    %v289 = vld [vmem:[#allocation5 + $0x2b8] sm:$0xff]
    %v290 = vld [vmem:[#allocation5 + $0x2c0] sm:$0xff]
    %v291 = vld [vmem:[#allocation5 + $0x2c8] sm:$0xff]
    %v292 = vld [vmem:[#allocation5 + $0x2d0] sm:$0xff]
    %v293 = vld [vmem:[#allocation5 + $0x2d8] sm:$0xff]
    %v294 = vld [vmem:[#allocation5 + $0x2e0] sm:$0xff]
    %v295 = vld [vmem:[#allocation5 + $0x2e8] sm:$0xff]
    %v296 = vld [vmem:[#allocation5 + $0x2f0] sm:$0xff]
    %v297 = vld [vmem:[#allocation5 + $0x2f8] sm:$0xff]
    %v298 = vld [vmem:[#allocation5 + $0x300] sm:$0xff]
    %v299 = vld [vmem:[#allocation5 + $0x308] sm:$0xff]
    %v300 = vld [vmem:[#allocation7] sm:$0x3]
    %v302 = vperm.slane %v300, 0
    %v303 = vperm.slane %v300, 1
    %v404 = vunpack.c.l.b16 %v202
    %v405 = vunpack.c.h.b16 %v202
    %v406 = vunpack.c.l.b16 %v203
    %v407 = vunpack.c.h.b16 %v203
    %v408 = vunpack.c.l.b16 %v204
    %v409 = vunpack.c.h.b16 %v204
    %v410 = vunpack.c.l.b16 %v205
    %v411 = vunpack.c.h.b16 %v205
    %v412 = vunpack.c.l.b16 %v206
    %v413 = vunpack.c.h.b16 %v206
    %v414 = vunpack.c.l.b16 %v207
    %v415 = vunpack.c.h.b16 %v207
    %v416 = vunpack.c.l.b16 %v208
    %v417 = vunpack.c.h.b16 %v208
    %v418 = vunpack.c.l.b16 %v209
    %v419 = vunpack.c.h.b16 %v209
    %v420 = vunpack.c.l.b16 %v210
    %v421 = vunpack.c.h.b16 %v210
    %v422 = vunpack.c.l.b16 %v211
    %v423 = vunpack.c.h.b16 %v211
    %v424 = vunpack.c.l.b16 %v212
    %v425 = vunpack.c.h.b16 %v212
    %v426 = vunpack.c.l.b16 %v213
    %v427 = vunpack.c.h.b16 %v213
    %v428 = vunpack.c.l.b16 %v214
    %v429 = vunpack.c.h.b16 %v214
    %v430 = vunpack.c.l.b16 %v215
    %v431 = vunpack.c.h.b16 %v215
    %v432 = vunpack.c.l.b16 %v216
    %v433 = vunpack.c.h.b16 %v216
    %v434 = vunpack.c.l.b16 %v217
    %v435 = vunpack.c.h.b16 %v217
    %v436 = vunpack.c.l.b16 %v218
    %v437 = vunpack.c.h.b16 %v218
    %v438 = vunpack.c.l.b16 %v219
    %v439 = vunpack.c.h.b16 %v219
    %v440 = vunpack.c.l.b16 %v220
    %v441 = vunpack.c.h.b16 %v220
    %v442 = vunpack.c.l.b16 %v221
    %v443 = vunpack.c.h.b16 %v221
    %v444 = vunpack.c.l.b16 %v222
    %v445 = vunpack.c.h.b16 %v222
    %v446 = vunpack.c.l.b16 %v223
    %v447 = vunpack.c.h.b16 %v223
    %v448 = vunpack.c.l.b16 %v224
    %v449 = vunpack.c.h.b16 %v224
    %v450 = vunpack.c.l.b16 %v225
    %v451 = vunpack.c.h.b16 %v225
    %v452 = vunpack.c.l.b16 %v226
    %v453 = vunpack.c.h.b16 %v226
    %v454 = vunpack.c.l.b16 %v227
    %v455 = vunpack.c.h.b16 %v227
    %v456 = vunpack.c.l.b16 %v228
    %v457 = vunpack.c.h.b16 %v228
    %v458 = vunpack.c.l.b16 %v229
    %v459 = vunpack.c.h.b16 %v229
    %v460 = vunpack.c.l.b16 %v230
    %v461 = vunpack.c.h.b16 %v230
    %v462 = vunpack.c.l.b16 %v231
    %v463 = vunpack.c.h.b16 %v231
    %v464 = vunpack.c.l.b16 %v232
    %v465 = vunpack.c.h.b16 %v232
    %v466 = vunpack.c.l.b16 %v233
    %v467 = vunpack.c.h.b16 %v233
    %v468 = vunpack.c.l.b16 %v234
    %v469 = vunpack.c.h.b16 %v234
    %v470 = vunpack.c.l.b16 %v235
    %v471 = vunpack.c.h.b16 %v235
    %v472 = vunpack.c.l.b16 %v236
    %v473 = vunpack.c.h.b16 %v236
    %v474 = vunpack.c.l.b16 %v237
    %v475 = vunpack.c.h.b16 %v237
    %v476 = vunpack.c.l.b16 %v238
    %v477 = vunpack.c.h.b16 %v238
    %v478 = vunpack.c.l.b16 %v239
    %v479 = vunpack.c.h.b16 %v239
    %v480 = vunpack.c.l.b16 %v240
    %v481 = vunpack.c.h.b16 %v240
    %v482 = vunpack.c.l.b16 %v241
    %v483 = vunpack.c.h.b16 %v241
    %v484 = vunpack.c.l.b16 %v242
    %v485 = vunpack.c.h.b16 %v242
    %v486 = vunpack.c.l.b16 %v243
    %v487 = vunpack.c.h.b16 %v243
    %v488 = vunpack.c.l.b16 %v244
    %v489 = vunpack.c.h.b16 %v244
    %v490 = vunpack.c.l.b16 %v245
    %v491 = vunpack.c.h.b16 %v245
    %v492 = vunpack.c.l.b16 %v246
    %v493 = vunpack.c.h.b16 %v246
    %v494 = vunpack.c.l.b16 %v247
    %v495 = vunpack.c.h.b16 %v247
    %v496 = vunpack.c.l.b16 %v248
    %v497 = vunpack.c.h.b16 %v248
    %v498 = vunpack.c.l.b16 %v249
    %v499 = vunpack.c.h.b16 %v249
    %v500 = vunpack.c.l.b16 %v250
    %v501 = vunpack.c.h.b16 %v250
    %v502 = vunpack.c.l.b16 %v251
    %v503 = vunpack.c.h.b16 %v251
    %v504 = vunpack.c.l.b16 %v252
    %v505 = vunpack.c.h.b16 %v252
    %v506 = vunpack.c.l.b16 %v253
    %v507 = vunpack.c.h.b16 %v253
    %v508 = vunpack.c.l.b16 %v254
    %v509 = vunpack.c.h.b16 %v254
    %v510 = vunpack.c.l.b16 %v255
    %v511 = vunpack.c.h.b16 %v255
    %v512 = vunpack.c.l.b16 %v256
    %v513 = vunpack.c.h.b16 %v256
    %v514 = vunpack.c.l.b16 %v257
    %v515 = vunpack.c.h.b16 %v257
    %v516 = vunpack.c.l.b16 %v258
    %v517 = vunpack.c.h.b16 %v258
    %v518 = vunpack.c.l.b16 %v259
    %v519 = vunpack.c.h.b16 %v259
    %v520 = vunpack.c.l.b16 %v260
    %v521 = vunpack.c.h.b16 %v260
    %v522 = vunpack.c.l.b16 %v261
    %v523 = vunpack.c.h.b16 %v261
    %v524 = vunpack.c.l.b16 %v262
    %v525 = vunpack.c.h.b16 %v262
    %v526 = vunpack.c.l.b16 %v263
    %v527 = vunpack.c.h.b16 %v263
    %v528 = vunpack.c.l.b16 %v264
    %v529 = vunpack.c.h.b16 %v264
    %v530 = vunpack.c.l.b16 %v265
    %v531 = vunpack.c.h.b16 %v265
    %v532 = vunpack.c.l.b16 %v266
    %v533 = vunpack.c.h.b16 %v266
    %v534 = vunpack.c.l.b16 %v267
    %v535 = vunpack.c.h.b16 %v267
    %v536 = vunpack.c.l.b16 %v268
    %v537 = vunpack.c.h.b16 %v268
    %v538 = vunpack.c.l.b16 %v269
    %v539 = vunpack.c.h.b16 %v269
    %v540 = vunpack.c.l.b16 %v270
    %v541 = vunpack.c.h.b16 %v270
    %v542 = vunpack.c.l.b16 %v271
    %v543 = vunpack.c.h.b16 %v271
    %v544 = vunpack.c.l.b16 %v272
    %v545 = vunpack.c.h.b16 %v272
    %v546 = vunpack.c.l.b16 %v273
    %v547 = vunpack.c.h.b16 %v273
    %v548 = vunpack.c.l.b16 %v274
    %v549 = vunpack.c.h.b16 %v274
    %v550 = vunpack.c.l.b16 %v275
    %v551 = vunpack.c.h.b16 %v275
    %v552 = vunpack.c.l.b16 %v276
    %v553 = vunpack.c.h.b16 %v276
    %v554 = vunpack.c.l.b16 %v277
    %v555 = vunpack.c.h.b16 %v277
    %v556 = vunpack.c.l.b16 %v278
    %v557 = vunpack.c.h.b16 %v278
    %v558 = vunpack.c.l.b16 %v279
    %v559 = vunpack.c.h.b16 %v279
    %v560 = vunpack.c.l.b16 %v280
    %v561 = vunpack.c.h.b16 %v280
    %v562 = vunpack.c.l.b16 %v281
    %v563 = vunpack.c.h.b16 %v281
    %v564 = vunpack.c.l.b16 %v282
    %v565 = vunpack.c.h.b16 %v282
    %v566 = vunpack.c.l.b16 %v283
    %v567 = vunpack.c.h.b16 %v283
    %v568 = vunpack.c.l.b16 %v284
    %v569 = vunpack.c.h.b16 %v284
    %v570 = vunpack.c.l.b16 %v285
    %v571 = vunpack.c.h.b16 %v285
    %v572 = vunpack.c.l.b16 %v286
    %v573 = vunpack.c.h.b16 %v286
    %v574 = vunpack.c.l.b16 %v287
    %v575 = vunpack.c.h.b16 %v287
    %v576 = vunpack.c.l.b16 %v288
    %v577 = vunpack.c.h.b16 %v288
    %v578 = vunpack.c.l.b16 %v289
    %v579 = vunpack.c.h.b16 %v289
    %v580 = vunpack.c.l.b16 %v290
    %v581 = vunpack.c.h.b16 %v290
    %v582 = vunpack.c.l.b16 %v291
    %v583 = vunpack.c.h.b16 %v291
    %v584 = vunpack.c.l.b16 %v292
    %v585 = vunpack.c.h.b16 %v292
    %v586 = vunpack.c.l.b16 %v293
    %v587 = vunpack.c.h.b16 %v293
    %v588 = vunpack.c.l.b16 %v294
    %v589 = vunpack.c.h.b16 %v294
    %v590 = vunpack.c.l.b16 %v295
    %v591 = vunpack.c.h.b16 %v295
    %v592 = vunpack.c.l.b16 %v296
    %v593 = vunpack.c.h.b16 %v296
    %v594 = vunpack.c.l.b16 %v297
    %v595 = vunpack.c.h.b16 %v297
    %v596 = vunpack.c.l.b16 %v298
    %v597 = vunpack.c.h.b16 %v298
    %v598 = vunpack.c.l.b16 %v299
    %v599 = vunpack.c.h.b16 %v299
    %v600 = vpack.c.b16 %v406, %v404
    %v601 = vpack.c.b16 %v407, %v405
    %v602 = vpack.c.b16 %v410, %v408
    %v603 = vpack.c.b16 %v411, %v409
    %v604 = vpack.c.b16 %v414, %v412
    %v605 = vpack.c.b16 %v415, %v413
    %v606 = vpack.c.b16 %v418, %v416
    %v607 = vpack.c.b16 %v419, %v417
    %v608 = vpack.c.b16 %v422, %v420
    %v609 = vpack.c.b16 %v423, %v421
    %v610 = vpack.c.b16 %v426, %v424
    %v611 = vpack.c.b16 %v427, %v425
    %v612 = vpack.c.b16 %v430, %v428
    %v613 = vpack.c.b16 %v431, %v429
    %v614 = vpack.c.b16 %v434, %v432
    %v615 = vpack.c.b16 %v435, %v433
    %v616 = vpack.c.b16 %v438, %v436
    %v617 = vpack.c.b16 %v439, %v437
    %v618 = vpack.c.b16 %v442, %v440
    %v619 = vpack.c.b16 %v443, %v441
    %v620 = vpack.c.b16 %v446, %v444
    %v621 = vpack.c.b16 %v447, %v445
    %v622 = vpack.c.b16 %v450, %v448
    %v623 = vpack.c.b16 %v451, %v449
    %v624 = vpack.c.b16 %v454, %v452
    %v625 = vpack.c.b16 %v455, %v453
    %v626 = vpack.c.b16 %v458, %v456
    %v627 = vpack.c.b16 %v459, %v457
    %v628 = vpack.c.b16 %v462, %v460
    %v629 = vpack.c.b16 %v463, %v461
    %v630 = vpack.c.b16 %v466, %v464
    %v631 = vpack.c.b16 %v467, %v465
    %v632 = vpack.c.b16 %v470, %v468
    %v633 = vpack.c.b16 %v471, %v469
    %v634 = vpack.c.b16 %v474, %v472
    %v635 = vpack.c.b16 %v475, %v473
    %v636 = vpack.c.b16 %v478, %v476
    %v637 = vpack.c.b16 %v479, %v477
    %v638 = vpack.c.b16 %v482, %v480
    %v639 = vpack.c.b16 %v483, %v481
    %v640 = vpack.c.b16 %v486, %v484
    %v641 = vpack.c.b16 %v487, %v485
    %v642 = vpack.c.b16 %v490, %v488
    %v643 = vpack.c.b16 %v491, %v489
    %v644 = vpack.c.b16 %v494, %v492
    %v645 = vpack.c.b16 %v495, %v493
    %v646 = vpack.c.b16 %v498, %v496
    %v647 = vpack.c.b16 %v499, %v497
    %v648 = vpack.c.b16 %v502, %v500
    %v649 = vpack.c.b16 %v503, %v501
    %v650 = vpack.c.b16 %v506, %v504
    %v651 = vpack.c.b16 %v507, %v505
    %v652 = vpack.c.b16 %v510, %v508
    %v653 = vpack.c.b16 %v511, %v509
    %v654 = vpack.c.b16 %v514, %v512
    %v655 = vpack.c.b16 %v515, %v513
    %v656 = vpack.c.b16 %v518, %v516
    %v657 = vpack.c.b16 %v519, %v517
    %v658 = vpack.c.b16 %v522, %v520
    %v659 = vpack.c.b16 %v523, %v521
    %v660 = vpack.c.b16 %v526, %v524
    %v661 = vpack.c.b16 %v527, %v525
    %v662 = vpack.c.b16 %v530, %v528
    %v663 = vpack.c.b16 %v531, %v529
    %v664 = vpack.c.b16 %v534, %v532
    %v665 = vpack.c.b16 %v535, %v533
    %v666 = vpack.c.b16 %v538, %v536
    %v667 = vpack.c.b16 %v539, %v537
    %v668 = vpack.c.b16 %v542, %v540
    %v669 = vpack.c.b16 %v543, %v541
    %v670 = vpack.c.b16 %v546, %v544
    %v671 = vpack.c.b16 %v547, %v545
    %v672 = vpack.c.b16 %v550, %v548
    %v673 = vpack.c.b16 %v551, %v549
    %v674 = vpack.c.b16 %v554, %v552
    %v675 = vpack.c.b16 %v555, %v553
    %v676 = vpack.c.b16 %v558, %v556
    %v677 = vpack.c.b16 %v559, %v557
    %v678 = vpack.c.b16 %v562, %v560
    %v679 = vpack.c.b16 %v563, %v561
    %v680 = vpack.c.b16 %v566, %v564
    %v681 = vpack.c.b16 %v567, %v565
    %v682 = vpack.c.b16 %v570, %v568
    %v683 = vpack.c.b16 %v571, %v569
    %v684 = vpack.c.b16 %v574, %v572
    %v685 = vpack.c.b16 %v575, %v573
    %v686 = vpack.c.b16 %v578, %v576
    %v687 = vpack.c.b16 %v579, %v577
    %v688 = vpack.c.b16 %v582, %v580
    %v689 = vpack.c.b16 %v583, %v581
    %v690 = vpack.c.b16 %v586, %v584
    %v691 = vpack.c.b16 %v587, %v585
    %v692 = vpack.c.b16 %v590, %v588
    %v693 = vpack.c.b16 %v591, %v589
    %v694 = vpack.c.b16 %v594, %v592
    %v695 = vpack.c.b16 %v595, %v593
    %v696 = vpack.c.b16 %v598, %v596
    %v697 = vpack.c.b16 %v599, %v597
    %vm796 = vcmask 130048
    %v798 = vsel %vm796, %v180, 0
    %v801 = vsel %vm796, %v187, 0
    %v804 = vsel %vm796, %v194, 0
    %v807 = vsel %vm796, %v201, 0
    %809 = vmatpush.bf16.msra.mxu0 %v614
    %810 = vmatpush.bf16.msra.mxu0 %v612
    %811 = vmatpush.bf16.msra.mxu0 %v610
    %812 = vmatpush.bf16.msra.mxu0 %v608
    %813 = vmatpush.bf16.msra.mxu0 %v606
    %814 = vmatpush.bf16.msra.mxu0 %v604
    %815 = vmatpush.bf16.msra.mxu0 %v602
    %816 = vmatpush.bf16.msra.mxu0 %v600
    %817 = vmatmul.bf16.gmra.mxu0 %v174
    %v818 = vpop.f32.mrf.mxu0
    %v819 = vadd.f32 %v302, %v818
    %v820 = vpop.f32.mrf.mxu0
    %v821 = vadd.f32 %v302, %v820
    %822 = vmatmul.bf16.gmra.mxu0 %v181
    %v823 = vpop.f32.mrf.mxu0
    %v824 = vadd.f32 %v302, %v823
    %v825 = vpop.f32.mrf.mxu0
    %v826 = vadd.f32 %v302, %v825
    %827 = vmatmul.bf16.gmra.mxu0 %v188
    %v828 = vpop.f32.mrf.mxu0
    %v829 = vadd.f32 %v302, %v828
    %v830 = vpop.f32.mrf.mxu0
    %v831 = vadd.f32 %v302, %v830
    %832 = vmatmul.bf16.gmra.mxu0 %v195
    %v833 = vpop.f32.mrf.mxu0
    %v834 = vadd.f32 %v302, %v833
    %v835 = vpop.f32.mrf.mxu0
    %v836 = vadd.f32 %v302, %v835
    %837 = vdwg.mxu0
    %838 = vmatpush.bf16.msra.mxu0 %v630
    %839 = vmatpush.bf16.msra.mxu0 %v628
    %840 = vmatpush.bf16.msra.mxu0 %v626
    %841 = vmatpush.bf16.msra.mxu0 %v624
    %842 = vmatpush.bf16.msra.mxu0 %v622
    %843 = vmatpush.bf16.msra.mxu0 %v620
    %844 = vmatpush.bf16.msra.mxu0 %v618
    %845 = vmatpush.bf16.msra.mxu0 %v616
    %846 = vmatmul.bf16.gmra.mxu0 %v175
    %v847 = vpop.f32.mrf.mxu0
    %v848 = vadd.f32 %v819, %v847
    %v849 = vpop.f32.mrf.mxu0
    %v850 = vadd.f32 %v821, %v849
    %851 = vmatmul.bf16.gmra.mxu0 %v182
    %v852 = vpop.f32.mrf.mxu0
    %v853 = vadd.f32 %v824, %v852
    %v854 = vpop.f32.mrf.mxu0
    %v855 = vadd.f32 %v826, %v854
    %856 = vmatmul.bf16.gmra.mxu0 %v189
    %v857 = vpop.f32.mrf.mxu0
    %v858 = vadd.f32 %v829, %v857
    %v859 = vpop.f32.mrf.mxu0
    %v860 = vadd.f32 %v831, %v859
    %861 = vmatmul.bf16.gmra.mxu0 %v196
    %v862 = vpop.f32.mrf.mxu0
    %v863 = vadd.f32 %v834, %v862
    %v864 = vpop.f32.mrf.mxu0
    %v865 = vadd.f32 %v836, %v864
    %866 = vdwg.mxu0
    %867 = vmatpush.bf16.msra.mxu0 %v646
    %868 = vmatpush.bf16.msra.mxu0 %v644
    %869 = vmatpush.bf16.msra.mxu0 %v642
    %870 = vmatpush.bf16.msra.mxu0 %v640
    %871 = vmatpush.bf16.msra.mxu0 %v638
    %872 = vmatpush.bf16.msra.mxu0 %v636
    %873 = vmatpush.bf16.msra.mxu0 %v634
    %874 = vmatpush.bf16.msra.mxu0 %v632
    %875 = vmatmul.bf16.gmra.mxu0 %v176
    %v876 = vpop.f32.mrf.mxu0
    %v877 = vadd.f32 %v848, %v876
    %v878 = vpop.f32.mrf.mxu0
    %v879 = vadd.f32 %v850, %v878
    %880 = vmatmul.bf16.gmra.mxu0 %v183
    %v881 = vpop.f32.mrf.mxu0
    %v882 = vadd.f32 %v853, %v881
    %v883 = vpop.f32.mrf.mxu0
    %v884 = vadd.f32 %v855, %v883
    %885 = vmatmul.bf16.gmra.mxu0 %v190
    %v886 = vpop.f32.mrf.mxu0
    %v887 = vadd.f32 %v858, %v886
    %v888 = vpop.f32.mrf.mxu0
    %v889 = vadd.f32 %v860, %v888
    %890 = vmatmul.bf16.gmra.mxu0 %v197
    %v891 = vpop.f32.mrf.mxu0
    %v892 = vadd.f32 %v863, %v891
    %v893 = vpop.f32.mrf.mxu0
    %v894 = vadd.f32 %v865, %v893
    %895 = vdwg.mxu0
    %896 = vmatpush.bf16.msra.mxu0 %v662
    %897 = vmatpush.bf16.msra.mxu0 %v660
    %898 = vmatpush.bf16.msra.mxu0 %v658
    %899 = vmatpush.bf16.msra.mxu0 %v656
    %900 = vmatpush.bf16.msra.mxu0 %v654
    %901 = vmatpush.bf16.msra.mxu0 %v652
    %902 = vmatpush.bf16.msra.mxu0 %v650
    %903 = vmatpush.bf16.msra.mxu0 %v648
    %904 = vmatmul.bf16.gmra.mxu0 %v177
    %v905 = vpop.f32.mrf.mxu0
    %v906 = vadd.f32 %v877, %v905
    %v907 = vpop.f32.mrf.mxu0
    %v908 = vadd.f32 %v879, %v907
    %909 = vmatmul.bf16.gmra.mxu0 %v184
    %v910 = vpop.f32.mrf.mxu0
    %v911 = vadd.f32 %v882, %v910
    %v912 = vpop.f32.mrf.mxu0
    %v913 = vadd.f32 %v884, %v912
    %914 = vmatmul.bf16.gmra.mxu0 %v191
    %v915 = vpop.f32.mrf.mxu0
    %v916 = vadd.f32 %v887, %v915
    %v917 = vpop.f32.mrf.mxu0
    %v918 = vadd.f32 %v889, %v917
    %919 = vmatmul.bf16.gmra.mxu0 %v198
    %v920 = vpop.f32.mrf.mxu0
    %v921 = vadd.f32 %v892, %v920
    %v922 = vpop.f32.mrf.mxu0
    %v923 = vadd.f32 %v894, %v922
    %924 = vdwg.mxu0
    %925 = vmatpush.bf16.msra.mxu0 %v678
    %926 = vmatpush.bf16.msra.mxu0 %v676
    %927 = vmatpush.bf16.msra.mxu0 %v674
    %928 = vmatpush.bf16.msra.mxu0 %v672
    %929 = vmatpush.bf16.msra.mxu0 %v670
    %930 = vmatpush.bf16.msra.mxu0 %v668
    %931 = vmatpush.bf16.msra.mxu0 %v666
    %932 = vmatpush.bf16.msra.mxu0 %v664
    %933 = vmatmul.bf16.gmra.mxu0 %v178
    %v934 = vpop.f32.mrf.mxu0
    %v935 = vadd.f32 %v906, %v934
    %v936 = vpop.f32.mrf.mxu0
    %v937 = vadd.f32 %v908, %v936
    %938 = vmatmul.bf16.gmra.mxu0 %v185
    %v939 = vpop.f32.mrf.mxu0
    %v940 = vadd.f32 %v911, %v939
    %v941 = vpop.f32.mrf.mxu0
    %v942 = vadd.f32 %v913, %v941
    %943 = vmatmul.bf16.gmra.mxu0 %v192
    %v944 = vpop.f32.mrf.mxu0
    %v945 = vadd.f32 %v916, %v944
    %v946 = vpop.f32.mrf.mxu0
    %v947 = vadd.f32 %v918, %v946
    %948 = vmatmul.bf16.gmra.mxu0 %v199
    %v949 = vpop.f32.mrf.mxu0
    %v950 = vadd.f32 %v921, %v949
    %v951 = vpop.f32.mrf.mxu0
    %v952 = vadd.f32 %v923, %v951
    %953 = vdwg.mxu0
    %954 = vmatpush.bf16.msra.mxu0 %v694
    %955 = vmatpush.bf16.msra.mxu0 %v692
    %956 = vmatpush.bf16.msra.mxu0 %v690
    %957 = vmatpush.bf16.msra.mxu0 %v688
    %958 = vmatpush.bf16.msra.mxu0 %v686
    %959 = vmatpush.bf16.msra.mxu0 %v684
    %960 = vmatpush.bf16.msra.mxu0 %v682
    %961 = vmatpush.bf16.msra.mxu0 %v680
    %962 = vmatmul.bf16.gmra.mxu0 %v179
    %v963 = vpop.f32.mrf.mxu0
    %v964 = vadd.f32 %v935, %v963
    %v965 = vpop.f32.mrf.mxu0
    %v966 = vadd.f32 %v937, %v965
    %967 = vmatmul.bf16.gmra.mxu0 %v186
    %v968 = vpop.f32.mrf.mxu0
    %v969 = vadd.f32 %v940, %v968
    %v970 = vpop.f32.mrf.mxu0
    %v971 = vadd.f32 %v942, %v970
    %972 = vmatmul.bf16.gmra.mxu0 %v193
    %v973 = vpop.f32.mrf.mxu0
    %v974 = vadd.f32 %v945, %v973
    %v975 = vpop.f32.mrf.mxu0
    %v976 = vadd.f32 %v947, %v975
    %977 = vmatmul.bf16.gmra.mxu0 %v200
    %v978 = vpop.f32.mrf.mxu0
    %v979 = vadd.f32 %v950, %v978
    %v980 = vpop.f32.mrf.mxu0
    %v981 = vadd.f32 %v952, %v980
    %982 = vdwg.mxu0
    %983 = vmatpush.bf16.msra.mxu0 0
    %984 = vmatpush.bf16.msra.mxu0 0
    %985 = vmatpush.bf16.msra.mxu0 0
    %986 = vmatpush.bf16.msra.mxu0 0
    %987 = vmatpush.bf16.msra.mxu0 0
    %988 = vmatpush.bf16.msra.mxu0 0
    %989 = vmatpush.bf16.msra.mxu0 0
    %990 = vmatpush.bf16.msra.mxu0 %v696
    %991 = vmatmul.bf16.gmra.mxu0 %v798
    %v992 = vpop.f32.mrf.mxu0
    %v993 = vadd.f32 %v964, %v992
    %v994 = vpop.f32.mrf.mxu0
    %v995 = vadd.f32 %v966, %v994
    %996 = vmatmul.bf16.gmra.mxu0 %v801
    %v997 = vpop.f32.mrf.mxu0
    %v998 = vadd.f32 %v969, %v997
    %v999 = vpop.f32.mrf.mxu0
    %v1000 = vadd.f32 %v971, %v999
    %1001 = vmatmul.bf16.gmra.mxu0 %v804
    %v1002 = vpop.f32.mrf.mxu0
    %v1003 = vadd.f32 %v974, %v1002
    %v1004 = vpop.f32.mrf.mxu0
    %v1005 = vadd.f32 %v976, %v1004
    %1006 = vmatmul.bf16.gmra.mxu0 %v807
    %v1007 = vpop.f32.mrf.mxu0
    %v1008 = vadd.f32 %v979, %v1007
    %v1009 = vpop.f32.mrf.mxu0
    %v1010 = vadd.f32 %v981, %v1009
    %1011 = vdwg.mxu0
    %1012 = vmatpush.bf16.msra.mxu0 %v615
    %1013 = vmatpush.bf16.msra.mxu0 %v613
    %1014 = vmatpush.bf16.msra.mxu0 %v611
    %1015 = vmatpush.bf16.msra.mxu0 %v609
    %1016 = vmatpush.bf16.msra.mxu0 %v607
    %1017 = vmatpush.bf16.msra.mxu0 %v605
    %1018 = vmatpush.bf16.msra.mxu0 %v603
    %1019 = vmatpush.bf16.msra.mxu0 %v601
    %1020 = vmatmul.bf16.gmra.mxu0 %v174
    %v1021 = vpop.f32.mrf.mxu0
    %v1022 = vadd.f32 %v303, %v1021
    %v1023 = vpop.f32.mrf.mxu0
    %v1024 = vadd.f32 %v303, %v1023
    %1025 = vmatmul.bf16.gmra.mxu0 %v181
    %v1026 = vpop.f32.mrf.mxu0
    %v1027 = vadd.f32 %v303, %v1026
    %v1028 = vpop.f32.mrf.mxu0
    %v1029 = vadd.f32 %v303, %v1028
    %1030 = vmatmul.bf16.gmra.mxu0 %v188
    %v1031 = vpop.f32.mrf.mxu0
    %v1032 = vadd.f32 %v303, %v1031
    %v1033 = vpop.f32.mrf.mxu0
    %v1034 = vadd.f32 %v303, %v1033
    %1035 = vmatmul.bf16.gmra.mxu0 %v195
    %v1036 = vpop.f32.mrf.mxu0
    %v1037 = vadd.f32 %v303, %v1036
    %v1038 = vpop.f32.mrf.mxu0
    %v1039 = vadd.f32 %v303, %v1038
    %1040 = vdwg.mxu0
    %1041 = vmatpush.bf16.msra.mxu0 %v631
    %1042 = vmatpush.bf16.msra.mxu0 %v629
    %1043 = vmatpush.bf16.msra.mxu0 %v627
    %1044 = vmatpush.bf16.msra.mxu0 %v625
    %1045 = vmatpush.bf16.msra.mxu0 %v623
    %1046 = vmatpush.bf16.msra.mxu0 %v621
    %1047 = vmatpush.bf16.msra.mxu0 %v619
    %1048 = vmatpush.bf16.msra.mxu0 %v617
    %1049 = vmatmul.bf16.gmra.mxu0 %v175
    %v1050 = vpop.f32.mrf.mxu0
    %v1051 = vadd.f32 %v1022, %v1050
    %v1052 = vpop.f32.mrf.mxu0
    %v1053 = vadd.f32 %v1024, %v1052
    %1054 = vmatmul.bf16.gmra.mxu0 %v182
    %v1055 = vpop.f32.mrf.mxu0
    %v1056 = vadd.f32 %v1027, %v1055
    %v1057 = vpop.f32.mrf.mxu0
    %v1058 = vadd.f32 %v1029, %v1057
    %1059 = vmatmul.bf16.gmra.mxu0 %v189
    %v1060 = vpop.f32.mrf.mxu0
    %v1061 = vadd.f32 %v1032, %v1060
    %v1062 = vpop.f32.mrf.mxu0
    %v1063 = vadd.f32 %v1034, %v1062
    %1064 = vmatmul.bf16.gmra.mxu0 %v196
    %v1065 = vpop.f32.mrf.mxu0
    %v1066 = vadd.f32 %v1037, %v1065
    %v1067 = vpop.f32.mrf.mxu0
    %v1068 = vadd.f32 %v1039, %v1067
    %1069 = vdwg.mxu0
    %1070 = vmatpush.bf16.msra.mxu0 %v647
    %1071 = vmatpush.bf16.msra.mxu0 %v645
    %1072 = vmatpush.bf16.msra.mxu0 %v643
    %1073 = vmatpush.bf16.msra.mxu0 %v641
    %1074 = vmatpush.bf16.msra.mxu0 %v639
    %1075 = vmatpush.bf16.msra.mxu0 %v637
    %1076 = vmatpush.bf16.msra.mxu0 %v635
    %1077 = vmatpush.bf16.msra.mxu0 %v633
    %1078 = vmatmul.bf16.gmra.mxu0 %v176
    %v1079 = vpop.f32.mrf.mxu0
    %v1080 = vadd.f32 %v1051, %v1079
    %v1081 = vpop.f32.mrf.mxu0
    %v1082 = vadd.f32 %v1053, %v1081
    %1083 = vmatmul.bf16.gmra.mxu0 %v183
    %v1084 = vpop.f32.mrf.mxu0
    %v1085 = vadd.f32 %v1056, %v1084
    %v1086 = vpop.f32.mrf.mxu0
    %v1087 = vadd.f32 %v1058, %v1086
    %1088 = vmatmul.bf16.gmra.mxu0 %v190
    %v1089 = vpop.f32.mrf.mxu0
    %v1090 = vadd.f32 %v1061, %v1089
    %v1091 = vpop.f32.mrf.mxu0
    %v1092 = vadd.f32 %v1063, %v1091
    %1093 = vmatmul.bf16.gmra.mxu0 %v197
    %v1094 = vpop.f32.mrf.mxu0
    %v1095 = vadd.f32 %v1066, %v1094
    %v1096 = vpop.f32.mrf.mxu0
    %v1097 = vadd.f32 %v1068, %v1096
    %1098 = vdwg.mxu0
    %1099 = vmatpush.bf16.msra.mxu0 %v663
    %1100 = vmatpush.bf16.msra.mxu0 %v661
    %1101 = vmatpush.bf16.msra.mxu0 %v659
    %1102 = vmatpush.bf16.msra.mxu0 %v657
    %1103 = vmatpush.bf16.msra.mxu0 %v655
    %1104 = vmatpush.bf16.msra.mxu0 %v653
    %1105 = vmatpush.bf16.msra.mxu0 %v651
    %1106 = vmatpush.bf16.msra.mxu0 %v649
    %1107 = vmatmul.bf16.gmra.mxu0 %v177
    %v1108 = vpop.f32.mrf.mxu0
    %v1109 = vadd.f32 %v1080, %v1108
    %v1110 = vpop.f32.mrf.mxu0
    %v1111 = vadd.f32 %v1082, %v1110
    %1112 = vmatmul.bf16.gmra.mxu0 %v184
    %v1113 = vpop.f32.mrf.mxu0
    %v1114 = vadd.f32 %v1085, %v1113
    %v1115 = vpop.f32.mrf.mxu0
    %v1116 = vadd.f32 %v1087, %v1115
    %1117 = vmatmul.bf16.gmra.mxu0 %v191
    %v1118 = vpop.f32.mrf.mxu0
    %v1119 = vadd.f32 %v1090, %v1118
    %v1120 = vpop.f32.mrf.mxu0
    %v1121 = vadd.f32 %v1092, %v1120
    %1122 = vmatmul.bf16.gmra.mxu0 %v198
    %v1123 = vpop.f32.mrf.mxu0
    %v1124 = vadd.f32 %v1095, %v1123
    %v1125 = vpop.f32.mrf.mxu0
    %v1126 = vadd.f32 %v1097, %v1125
    %1127 = vdwg.mxu0
    %1128 = vmatpush.bf16.msra.mxu0 %v679
    %1129 = vmatpush.bf16.msra.mxu0 %v677
    %1130 = vmatpush.bf16.msra.mxu0 %v675
    %1131 = vmatpush.bf16.msra.mxu0 %v673
    %1132 = vmatpush.bf16.msra.mxu0 %v671
    %1133 = vmatpush.bf16.msra.mxu0 %v669
    %1134 = vmatpush.bf16.msra.mxu0 %v667
    %1135 = vmatpush.bf16.msra.mxu0 %v665
    %1136 = vmatmul.bf16.gmra.mxu0 %v178
    %v1137 = vpop.f32.mrf.mxu0
    %v1138 = vadd.f32 %v1109, %v1137
    %v1139 = vpop.f32.mrf.mxu0
    %v1140 = vadd.f32 %v1111, %v1139
    %1141 = vmatmul.bf16.gmra.mxu0 %v185
    %v1142 = vpop.f32.mrf.mxu0
    %v1143 = vadd.f32 %v1114, %v1142
    %v1144 = vpop.f32.mrf.mxu0
    %v1145 = vadd.f32 %v1116, %v1144
    %1146 = vmatmul.bf16.gmra.mxu0 %v192
    %v1147 = vpop.f32.mrf.mxu0
    %v1148 = vadd.f32 %v1119, %v1147
    %v1149 = vpop.f32.mrf.mxu0
    %v1150 = vadd.f32 %v1121, %v1149
    %1151 = vmatmul.bf16.gmra.mxu0 %v199
    %v1152 = vpop.f32.mrf.mxu0
    %v1153 = vadd.f32 %v1124, %v1152
    %v1154 = vpop.f32.mrf.mxu0
    %v1155 = vadd.f32 %v1126, %v1154
    %1156 = vdwg.mxu0
    %1157 = vmatpush.bf16.msra.mxu0 %v695
    %1158 = vmatpush.bf16.msra.mxu0 %v693
    %1159 = vmatpush.bf16.msra.mxu0 %v691
    %1160 = vmatpush.bf16.msra.mxu0 %v689
    %1161 = vmatpush.bf16.msra.mxu0 %v687
    %1162 = vmatpush.bf16.msra.mxu0 %v685
    %1163 = vmatpush.bf16.msra.mxu0 %v683
    %1164 = vmatpush.bf16.msra.mxu0 %v681
    %1165 = vmatmul.bf16.gmra.mxu0 %v179
    %v1166 = vpop.f32.mrf.mxu0
    %v1167 = vadd.f32 %v1138, %v1166
    %v1168 = vpop.f32.mrf.mxu0
    %v1169 = vadd.f32 %v1140, %v1168
    %1170 = vmatmul.bf16.gmra.mxu0 %v186
    %v1171 = vpop.f32.mrf.mxu0
    %v1172 = vadd.f32 %v1143, %v1171
    %v1173 = vpop.f32.mrf.mxu0
    %v1174 = vadd.f32 %v1145, %v1173
    %1175 = vmatmul.bf16.gmra.mxu0 %v193
    %v1176 = vpop.f32.mrf.mxu0
    %v1177 = vadd.f32 %v1148, %v1176
    %v1178 = vpop.f32.mrf.mxu0
    %v1179 = vadd.f32 %v1150, %v1178
    %1180 = vmatmul.bf16.gmra.mxu0 %v200
    %v1181 = vpop.f32.mrf.mxu0
    %v1182 = vadd.f32 %v1153, %v1181
    %v1183 = vpop.f32.mrf.mxu0
    %v1184 = vadd.f32 %v1155, %v1183
    %1185 = vdwg.mxu0
    %1186 = vmatpush.bf16.msra.mxu0 0
    %1187 = vmatpush.bf16.msra.mxu0 0
    %1188 = vmatpush.bf16.msra.mxu0 0
    %1189 = vmatpush.bf16.msra.mxu0 0
    %1190 = vmatpush.bf16.msra.mxu0 0
    %1191 = vmatpush.bf16.msra.mxu0 0
    %1192 = vmatpush.bf16.msra.mxu0 0
    %1193 = vmatpush.bf16.msra.mxu0 %v697
    %1194 = vmatmul.bf16.gmra.mxu0 %v798
    %v1195 = vpop.f32.mrf.mxu0
    %v1196 = vadd.f32 %v1167, %v1195
    %v1197 = vpop.f32.mrf.mxu0
    %v1198 = vadd.f32 %v1169, %v1197
    %1199 = vmatmul.bf16.gmra.mxu0 %v801
    %v1200 = vpop.f32.mrf.mxu0
    %v1201 = vadd.f32 %v1172, %v1200
    %v1202 = vpop.f32.mrf.mxu0
    %v1203 = vadd.f32 %v1174, %v1202
    %1204 = vmatmul.bf16.gmra.mxu0 %v804
    %v1205 = vpop.f32.mrf.mxu0
    %v1206 = vadd.f32 %v1177, %v1205
    %v1207 = vpop.f32.mrf.mxu0
    %v1208 = vadd.f32 %v1179, %v1207
    %1209 = vmatmul.bf16.gmra.mxu0 %v807
    %v1210 = vpop.f32.mrf.mxu0
    %v1211 = vadd.f32 %v1182, %v1210
    %v1212 = vpop.f32.mrf.mxu0
    %v1213 = vadd.f32 %v1184, %v1212
    %1214 = vdwg.mxu0
    %v1215 = vmax.f32 %v993, 0.0
    %v1216 = vmax.f32 %v1196, 0.0
    %v1217 = vmax.f32 %v995, 0.0
    %v1218 = vmax.f32 %v1198, 0.0
    %v1219 = vmax.f32 %v998, 0.0
    %v1220 = vmax.f32 %v1201, 0.0
    %v1221 = vmax.f32 %v1000, 0.0
    %v1222 = vmax.f32 %v1203, 0.0
    %v1223 = vmax.f32 %v1003, 0.0
    %v1224 = vmax.f32 %v1206, 0.0
    %v1225 = vmax.f32 %v1005, 0.0
    %v1226 = vmax.f32 %v1208, 0.0
    %v1227 = vmax.f32 %v1008, 0.0
    %v1228 = vmax.f32 %v1211, 0.0
    %v1229 = vmax.f32 %v1010, 0.0
    %v1230 = vmax.f32 %v1213, 0.0
    %v1231 = vpack.c.bf16 %v1217, %v1215
    %v1232 = vpack.c.bf16 %v1218, %v1216
    %v1233 = vpack.c.bf16 %v1221, %v1219
    %v1234 = vpack.c.bf16 %v1222, %v1220
    %v1235 = vpack.c.bf16 %v1225, %v1223
    %v1236 = vpack.c.bf16 %v1226, %v1224
    %v1237 = vpack.c.bf16 %v1229, %v1227
    %v1238 = vpack.c.bf16 %v1230, %v1228
    %v1239 = vld [vmem:[#allocation8] sm:$0xff]
    %v1240 = vld [vmem:[#allocation8 + $0x8] sm:$0xff]
    %v1241 = vld [vmem:[#allocation8 + $0x10] sm:$0xff]
    %v1242 = vld [vmem:[#allocation8 + $0x18] sm:$0xff]
    %v1243 = vld [vmem:[#allocation8 + $0x20] sm:$0xff]
    %v1244 = vld [vmem:[#allocation8 + $0x28] sm:$0xff]
    %v1245 = vld [vmem:[#allocation8 + $0x30] sm:$0xff]
    %v1246 = vld [vmem:[#allocation8 + $0x38] sm:$0xff]
    %v1247 = vld [vmem:[#allocation8 + $0x40] sm:$0xff]
    %v1248 = vld [vmem:[#allocation8 + $0x48] sm:$0xff]
    %v1249 = vld [vmem:[#allocation8 + $0x50] sm:$0xff]
    %v1250 = vld [vmem:[#allocation8 + $0x58] sm:$0xff]
    %v1251 = vld [vmem:[#allocation8 + $0x60] sm:$0xff]
    %v1252 = vld [vmem:[#allocation8 + $0x68] sm:$0xff]
    %v1253 = vld [vmem:[#allocation8 + $0x70] sm:$0xff]
    %v1254 = vld [vmem:[#allocation8 + $0x78] sm:$0xff]
    %v1255 = vld [vmem:[#allocation8 + $0x80] sm:$0xff]
    %v1256 = vld [vmem:[#allocation8 + $0x88] sm:$0xff]
    %v1257 = vld [vmem:[#allocation8 + $0x90] sm:$0xff]
    %v1258 = vld [vmem:[#allocation8 + $0x98] sm:$0xff]
    %v1259 = vld [vmem:[#allocation8 + $0xa0] sm:$0xff]
    %v1260 = vld [vmem:[#allocation8 + $0xa8] sm:$0xff]
    %v1261 = vld [vmem:[#allocation8 + $0xb0] sm:$0xff]
    %v1262 = vld [vmem:[#allocation8 + $0xb8] sm:$0xff]
    %v1263 = vld [vmem:[#allocation8 + $0xc0] sm:$0xff]
    %v1264 = vld [vmem:[#allocation8 + $0xc8] sm:$0xff]
    %v1265 = vld [vmem:[#allocation8 + $0xd0] sm:$0xff]
    %v1266 = vld [vmem:[#allocation8 + $0xd8] sm:$0xff]
    %v1267 = vld [vmem:[#allocation8 + $0xe0] sm:$0xff]
    %v1268 = vld [vmem:[#allocation8 + $0xe8] sm:$0xff]
    %v1269 = vld [vmem:[#allocation8 + $0xf0] sm:$0xff]
    %v1270 = vld [vmem:[#allocation8 + $0xf8] sm:$0xff]
    %v1271 = vld [vmem:[%s4] sm:$0x3]
    %v1273 = vperm.slane %v1271, 0
    %v1274 = vperm.slane %v1271, 1
    %v1309 = vunpack.c.l.b16 %v1239
    %v1310 = vunpack.c.h.b16 %v1239
    %v1311 = vunpack.c.l.b16 %v1240
    %v1312 = vunpack.c.h.b16 %v1240
    %v1313 = vunpack.c.l.b16 %v1241
    %v1314 = vunpack.c.h.b16 %v1241
    %v1315 = vunpack.c.l.b16 %v1242
    %v1316 = vunpack.c.h.b16 %v1242
    %v1317 = vunpack.c.l.b16 %v1243
    %v1318 = vunpack.c.h.b16 %v1243
    %v1319 = vunpack.c.l.b16 %v1244
    %v1320 = vunpack.c.h.b16 %v1244
    %v1321 = vunpack.c.l.b16 %v1245
    %v1322 = vunpack.c.h.b16 %v1245
    %v1323 = vunpack.c.l.b16 %v1246
    %v1324 = vunpack.c.h.b16 %v1246
    %v1325 = vunpack.c.l.b16 %v1247
    %v1326 = vunpack.c.h.b16 %v1247
    %v1327 = vunpack.c.l.b16 %v1248
    %v1328 = vunpack.c.h.b16 %v1248
    %v1329 = vunpack.c.l.b16 %v1249
    %v1330 = vunpack.c.h.b16 %v1249
    %v1331 = vunpack.c.l.b16 %v1250
    %v1332 = vunpack.c.h.b16 %v1250
    %v1333 = vunpack.c.l.b16 %v1251
    %v1334 = vunpack.c.h.b16 %v1251
    %v1335 = vunpack.c.l.b16 %v1252
    %v1336 = vunpack.c.h.b16 %v1252
    %v1337 = vunpack.c.l.b16 %v1253
    %v1338 = vunpack.c.h.b16 %v1253
    %v1339 = vunpack.c.l.b16 %v1254
    %v1340 = vunpack.c.h.b16 %v1254
    %v1341 = vunpack.c.l.b16 %v1255
    %v1342 = vunpack.c.h.b16 %v1255
    %v1343 = vunpack.c.l.b16 %v1256
    %v1344 = vunpack.c.h.b16 %v1256
    %v1345 = vunpack.c.l.b16 %v1257
    %v1346 = vunpack.c.h.b16 %v1257
    %v1347 = vunpack.c.l.b16 %v1258
    %v1348 = vunpack.c.h.b16 %v1258
    %v1349 = vunpack.c.l.b16 %v1259
    %v1350 = vunpack.c.h.b16 %v1259
    %v1351 = vunpack.c.l.b16 %v1260
    %v1352 = vunpack.c.h.b16 %v1260
    %v1353 = vunpack.c.l.b16 %v1261
    %v1354 = vunpack.c.h.b16 %v1261
    %v1355 = vunpack.c.l.b16 %v1262
    %v1356 = vunpack.c.h.b16 %v1262
    %v1357 = vunpack.c.l.b16 %v1263
    %v1358 = vunpack.c.h.b16 %v1263
    %v1359 = vunpack.c.l.b16 %v1264
    %v1360 = vunpack.c.h.b16 %v1264
    %v1361 = vunpack.c.l.b16 %v1265
    %v1362 = vunpack.c.h.b16 %v1265
    %v1363 = vunpack.c.l.b16 %v1266
    %v1364 = vunpack.c.h.b16 %v1266
    %v1365 = vunpack.c.l.b16 %v1267
    %v1366 = vunpack.c.h.b16 %v1267
    %v1367 = vunpack.c.l.b16 %v1268
    %v1368 = vunpack.c.h.b16 %v1268
    %v1369 = vunpack.c.l.b16 %v1269
    %v1370 = vunpack.c.h.b16 %v1269
    %v1371 = vunpack.c.l.b16 %v1270
    %v1372 = vunpack.c.h.b16 %v1270
    %v1373 = vpack.c.b16 %v1311, %v1309
    %v1374 = vpack.c.b16 %v1312, %v1310
    %v1375 = vpack.c.b16 %v1315, %v1313
    %v1376 = vpack.c.b16 %v1316, %v1314
    %v1377 = vpack.c.b16 %v1319, %v1317
    %v1378 = vpack.c.b16 %v1320, %v1318
    %v1379 = vpack.c.b16 %v1323, %v1321
    %v1380 = vpack.c.b16 %v1324, %v1322
    %v1381 = vpack.c.b16 %v1327, %v1325
    %v1382 = vpack.c.b16 %v1328, %v1326
    %v1383 = vpack.c.b16 %v1331, %v1329
    %v1384 = vpack.c.b16 %v1332, %v1330
    %v1385 = vpack.c.b16 %v1335, %v1333
    %v1386 = vpack.c.b16 %v1336, %v1334
    %v1387 = vpack.c.b16 %v1339, %v1337
    %v1388 = vpack.c.b16 %v1340, %v1338
    %v1389 = vpack.c.b16 %v1343, %v1341
    %v1390 = vpack.c.b16 %v1344, %v1342
    %v1391 = vpack.c.b16 %v1347, %v1345
    %v1392 = vpack.c.b16 %v1348, %v1346
    %v1393 = vpack.c.b16 %v1351, %v1349
    %v1394 = vpack.c.b16 %v1352, %v1350
    %v1395 = vpack.c.b16 %v1355, %v1353
    %v1396 = vpack.c.b16 %v1356, %v1354
    %v1397 = vpack.c.b16 %v1359, %v1357
    %v1398 = vpack.c.b16 %v1360, %v1358
    %v1399 = vpack.c.b16 %v1363, %v1361
    %v1400 = vpack.c.b16 %v1364, %v1362
    %v1401 = vpack.c.b16 %v1367, %v1365
    %v1402 = vpack.c.b16 %v1368, %v1366
    %v1403 = vpack.c.b16 %v1371, %v1369
    %v1404 = vpack.c.b16 %v1372, %v1370
    %1437 = vmatpush.bf16.msra.mxu0 %v1387
    %1438 = vmatpush.bf16.msra.mxu0 %v1385
    %1439 = vmatpush.bf16.msra.mxu0 %v1383
    %1440 = vmatpush.bf16.msra.mxu0 %v1381
    %1441 = vmatpush.bf16.msra.mxu0 %v1379
    %1442 = vmatpush.bf16.msra.mxu0 %v1377
    %1443 = vmatpush.bf16.msra.mxu0 %v1375
    %1444 = vmatpush.bf16.msra.mxu0 %v1373
    %1445 = vmatmul.bf16.gmra.mxu0 %v1231
    %v1446 = vpop.f32.mrf.mxu0
    %v1447 = vadd.f32 %v1273, %v1446
    %v1448 = vpop.f32.mrf.mxu0
    %v1449 = vadd.f32 %v1273, %v1448
    %1450 = vmatmul.bf16.gmra.mxu0 %v1233
    %v1451 = vpop.f32.mrf.mxu0
    %v1452 = vadd.f32 %v1273, %v1451
    %v1453 = vpop.f32.mrf.mxu0
    %v1454 = vadd.f32 %v1273, %v1453
    %1455 = vmatmul.bf16.gmra.mxu0 %v1235
    %v1456 = vpop.f32.mrf.mxu0
    %v1457 = vadd.f32 %v1273, %v1456
    %v1458 = vpop.f32.mrf.mxu0
    %v1459 = vadd.f32 %v1273, %v1458
    %1460 = vmatmul.bf16.gmra.mxu0 %v1237
    %v1461 = vpop.f32.mrf.mxu0
    %v1462 = vadd.f32 %v1273, %v1461
    %v1463 = vpop.f32.mrf.mxu0
    %v1464 = vadd.f32 %v1273, %v1463
    %1465 = vdwg.mxu0
    %1466 = vmatpush.bf16.msra.mxu0 %v1403
    %1467 = vmatpush.bf16.msra.mxu0 %v1401
    %1468 = vmatpush.bf16.msra.mxu0 %v1399
    %1469 = vmatpush.bf16.msra.mxu0 %v1397
    %1470 = vmatpush.bf16.msra.mxu0 %v1395
    %1471 = vmatpush.bf16.msra.mxu0 %v1393
    %1472 = vmatpush.bf16.msra.mxu0 %v1391
    %1473 = vmatpush.bf16.msra.mxu0 %v1389
    %1474 = vmatmul.bf16.gmra.mxu0 %v1232
    %v1475 = vpop.f32.mrf.mxu0
    %v1476 = vadd.f32 %v1447, %v1475
    %v1477 = vpop.f32.mrf.mxu0
    %v1478 = vadd.f32 %v1449, %v1477
    %1479 = vmatmul.bf16.gmra.mxu0 %v1234
    %v1480 = vpop.f32.mrf.mxu0
    %v1481 = vadd.f32 %v1452, %v1480
    %v1482 = vpop.f32.mrf.mxu0
    %v1483 = vadd.f32 %v1454, %v1482
    %1484 = vmatmul.bf16.gmra.mxu0 %v1236
    %v1485 = vpop.f32.mrf.mxu0
    %v1486 = vadd.f32 %v1457, %v1485
    %v1487 = vpop.f32.mrf.mxu0
    %v1488 = vadd.f32 %v1459, %v1487
    %1489 = vmatmul.bf16.gmra.mxu0 %v1238
    %v1490 = vpop.f32.mrf.mxu0
    %v1491 = vadd.f32 %v1462, %v1490
    %v1492 = vpop.f32.mrf.mxu0
    %v1493 = vadd.f32 %v1464, %v1492
    %1494 = vdwg.mxu0
    %1495 = vmatpush.bf16.msra.mxu0 %v1388
    %1496 = vmatpush.bf16.msra.mxu0 %v1386
    %1497 = vmatpush.bf16.msra.mxu0 %v1384
    %1498 = vmatpush.bf16.msra.mxu0 %v1382
    %1499 = vmatpush.bf16.msra.mxu0 %v1380
    %1500 = vmatpush.bf16.msra.mxu0 %v1378
    %1501 = vmatpush.bf16.msra.mxu0 %v1376
    %1502 = vmatpush.bf16.msra.mxu0 %v1374
    %1503 = vmatmul.bf16.gmra.mxu0 %v1231
    %v1504 = vpop.f32.mrf.mxu0
    %v1505 = vadd.f32 %v1274, %v1504
    %v1506 = vpop.f32.mrf.mxu0
    %v1507 = vadd.f32 %v1274, %v1506
    %1508 = vmatmul.bf16.gmra.mxu0 %v1233
    %v1509 = vpop.f32.mrf.mxu0
    %v1510 = vadd.f32 %v1274, %v1509
    %v1511 = vpop.f32.mrf.mxu0
    %v1512 = vadd.f32 %v1274, %v1511
    %1513 = vmatmul.bf16.gmra.mxu0 %v1235
    %v1514 = vpop.f32.mrf.mxu0
    %v1515 = vadd.f32 %v1274, %v1514
    %v1516 = vpop.f32.mrf.mxu0
    %v1517 = vadd.f32 %v1274, %v1516
    %1518 = vmatmul.bf16.gmra.mxu0 %v1237
    %v1519 = vpop.f32.mrf.mxu0
    %v1520 = vadd.f32 %v1274, %v1519
    %v1521 = vpop.f32.mrf.mxu0
    %v1522 = vadd.f32 %v1274, %v1521
    %1523 = vdwg.mxu0
    %1524 = vmatpush.bf16.msra.mxu0 %v1404
    %1525 = vmatpush.bf16.msra.mxu0 %v1402
    %1526 = vmatpush.bf16.msra.mxu0 %v1400
    %1527 = vmatpush.bf16.msra.mxu0 %v1398
    %1528 = vmatpush.bf16.msra.mxu0 %v1396
    %1529 = vmatpush.bf16.msra.mxu0 %v1394
    %1530 = vmatpush.bf16.msra.mxu0 %v1392
    %1531 = vmatpush.bf16.msra.mxu0 %v1390
    %1532 = vmatmul.bf16.gmra.mxu0 %v1232
    %v1533 = vpop.f32.mrf.mxu0
    %v1534 = vadd.f32 %v1505, %v1533
    %v1535 = vpop.f32.mrf.mxu0
    %v1536 = vadd.f32 %v1507, %v1535
    %1537 = vmatmul.bf16.gmra.mxu0 %v1234
    %v1538 = vpop.f32.mrf.mxu0
    %v1539 = vadd.f32 %v1510, %v1538
    %v1540 = vpop.f32.mrf.mxu0
    %v1541 = vadd.f32 %v1512, %v1540
    %1542 = vmatmul.bf16.gmra.mxu0 %v1236
    %v1543 = vpop.f32.mrf.mxu0
    %v1544 = vadd.f32 %v1515, %v1543
    %v1545 = vpop.f32.mrf.mxu0
    %v1546 = vadd.f32 %v1517, %v1545
    %1547 = vmatmul.bf16.gmra.mxu0 %v1238
    %v1548 = vpop.f32.mrf.mxu0
    %v1549 = vadd.f32 %v1520, %v1548
    %v1550 = vpop.f32.mrf.mxu0
    %v1551 = vadd.f32 %v1522, %v1550
    %1552 = vdwg.mxu0
    %v1553 = vmax.f32 %v1476, 0.0
    %v1554 = vmax.f32 %v1534, 0.0
    %v1555 = vmax.f32 %v1478, 0.0
    %v1556 = vmax.f32 %v1536, 0.0
    %v1557 = vmax.f32 %v1481, 0.0
    %v1558 = vmax.f32 %v1539, 0.0
    %v1559 = vmax.f32 %v1483, 0.0
    %v1560 = vmax.f32 %v1541, 0.0
    %v1561 = vmax.f32 %v1486, 0.0
    %v1562 = vmax.f32 %v1544, 0.0
    %v1563 = vmax.f32 %v1488, 0.0
    %v1564 = vmax.f32 %v1546, 0.0
    %v1565 = vmax.f32 %v1491, 0.0
    %v1566 = vmax.f32 %v1549, 0.0
    %v1567 = vmax.f32 %v1493, 0.0
    %v1568 = vmax.f32 %v1551, 0.0
    %v1569 = vpack.c.bf16 %v1555, %v1553
    %v1570 = vpack.c.bf16 %v1556, %v1554
    %v1571 = vpack.c.bf16 %v1559, %v1557
    %v1572 = vpack.c.bf16 %v1560, %v1558
    %v1573 = vpack.c.bf16 %v1563, %v1561
    %v1574 = vpack.c.bf16 %v1564, %v1562
    %v1575 = vpack.c.bf16 %v1567, %v1565
    %v1576 = vpack.c.bf16 %v1568, %v1566
    %v1577 = vld [vmem:[#allocation10] sm:$0xff]
    %v1578 = vld [vmem:[#allocation10 + $0x8] sm:$0xff]
    %v1579 = vld [vmem:[#allocation10 + $0x10] sm:$0xff]
    %v1580 = vld [vmem:[#allocation10 + $0x18] sm:$0xf]
    %v1581 = vld [vmem:[#allocation10 + $0x1c] sm:$0xff]
    %v1582 = vld [vmem:[#allocation10 + $0x24] sm:$0xff]
    %v1583 = vld [vmem:[#allocation10 + $0x2c] sm:$0xff]
    %v1584 = vld [vmem:[#allocation10 + $0x34] sm:$0xf]
    %v1585 = vld [vmem:[#allocation10 + $0x38] sm:$0xff]
    %v1586 = vld [vmem:[#allocation10 + $0x40] sm:$0xff]
    %v1587 = vld [vmem:[#allocation10 + $0x48] sm:$0xff]
    %v1588 = vld [vmem:[#allocation10 + $0x50] sm:$0xf]
    %v1589 = vld [vmem:[#allocation10 + $0x54] sm:$0xff]
    %v1590 = vld [vmem:[#allocation10 + $0x5c] sm:$0xff]
    %v1591 = vld [vmem:[#allocation10 + $0x64] sm:$0xff]
    %v1592 = vld [vmem:[#allocation10 + $0x6c] sm:$0xf]
    %v1593 = vld [vmem:[#allocation10 + $0x70] sm:$0xff]
    %v1594 = vld [vmem:[#allocation10 + $0x78] sm:$0xff]
    %v1595 = vld [vmem:[#allocation10 + $0x80] sm:$0xff]
    %v1596 = vld [vmem:[#allocation10 + $0x88] sm:$0xf]
    %v1597 = vld [vmem:[#allocation10 + $0x8c] sm:$0xff]
    %v1598 = vld [vmem:[#allocation10 + $0x94] sm:$0xff]
    %v1599 = vld [vmem:[#allocation10 + $0x9c] sm:$0xff]
    %v1600 = vld [vmem:[#allocation10 + $0xa4] sm:$0xf]
    %v1601 = vld [vmem:[#allocation10 + $0xa8] sm:$0xff]
    %v1602 = vld [vmem:[#allocation10 + $0xb0] sm:$0xff]
    %v1603 = vld [vmem:[#allocation10 + $0xb8] sm:$0xff]
    %v1604 = vld [vmem:[#allocation10 + $0xc0] sm:$0xf]
    %v1605 = vld [vmem:[#allocation10 + $0xc4] sm:$0xff]
    %v1606 = vld [vmem:[#allocation10 + $0xcc] sm:$0xff]
    %v1607 = vld [vmem:[#allocation10 + $0xd4] sm:$0xff]
    %v1608 = vld [vmem:[#allocation10 + $0xdc] sm:$0xf]
    %v1609 = vld [vmem:[#allocation10 + $0xe0] sm:$0xff]
    %v1610 = vld [vmem:[#allocation10 + $0xe8] sm:$0xff]
    %v1611 = vld [vmem:[#allocation10 + $0xf0] sm:$0xff]
    %v1612 = vld [vmem:[#allocation10 + $0xf8] sm:$0xf]
    %v1613 = vld [vmem:[#allocation10 + $0xfc] sm:$0xff]
    %v1614 = vld [vmem:[#allocation10 + $0x104] sm:$0xff]
    %v1615 = vld [vmem:[#allocation10 + $0x10c] sm:$0xff]
    %v1616 = vld [vmem:[#allocation10 + $0x114] sm:$0xf]
    %v1617 = vld [vmem:[#allocation10 + $0x118] sm:$0xff]
    %v1618 = vld [vmem:[#allocation10 + $0x120] sm:$0xff]
    %v1619 = vld [vmem:[#allocation10 + $0x128] sm:$0xff]
    %v1620 = vld [vmem:[#allocation10 + $0x130] sm:$0xf]
    %v1621 = vld [vmem:[#allocation10 + $0x134] sm:$0xff]
    %v1622 = vld [vmem:[#allocation10 + $0x13c] sm:$0xff]
    %v1623 = vld [vmem:[#allocation10 + $0x144] sm:$0xff]
    %v1624 = vld [vmem:[#allocation10 + $0x14c] sm:$0xf]
    %v1625 = vld [vmem:[#allocation10 + $0x150] sm:$0xff]
    %v1626 = vld [vmem:[#allocation10 + $0x158] sm:$0xff]
    %v1627 = vld [vmem:[#allocation10 + $0x160] sm:$0xff]
    %v1628 = vld [vmem:[#allocation10 + $0x168] sm:$0xf]
    %v1629 = vld [vmem:[#allocation10 + $0x16c] sm:$0xff]
    %v1630 = vld [vmem:[#allocation10 + $0x174] sm:$0xff]
    %v1631 = vld [vmem:[#allocation10 + $0x17c] sm:$0xff]
    %v1632 = vld [vmem:[#allocation10 + $0x184] sm:$0xf]
    %v1633 = vld [vmem:[#allocation10 + $0x188] sm:$0xff]
    %v1634 = vld [vmem:[#allocation10 + $0x190] sm:$0xff]
    %v1635 = vld [vmem:[#allocation10 + $0x198] sm:$0xff]
    %v1636 = vld [vmem:[#allocation10 + $0x1a0] sm:$0xf]
    %v1637 = vld [vmem:[#allocation10 + $0x1a4] sm:$0xff]
    %v1638 = vld [vmem:[#allocation10 + $0x1ac] sm:$0xff]
    %v1639 = vld [vmem:[#allocation10 + $0x1b4] sm:$0xff]
    %v1640 = vld [vmem:[#allocation10 + $0x1bc] sm:$0xf]
    %v1641 = vld [vmem:[#allocation10 + $0x1c0] sm:$0xff]
    %v1642 = vld [vmem:[#allocation10 + $0x1c8] sm:$0xff]
    %v1643 = vld [vmem:[#allocation10 + $0x1d0] sm:$0xff]
    %v1644 = vld [vmem:[#allocation10 + $0x1d8] sm:$0xf]
    %v1645 = vld [vmem:[#allocation10 + $0x1dc] sm:$0xff]
    %v1646 = vld [vmem:[#allocation10 + $0x1e4] sm:$0xff]
    %v1647 = vld [vmem:[#allocation10 + $0x1ec] sm:$0xff]
    %v1648 = vld [vmem:[#allocation10 + $0x1f4] sm:$0xf]
    %v1649 = vld [vmem:[#allocation10 + $0x1f8] sm:$0xff]
    %v1650 = vld [vmem:[#allocation10 + $0x200] sm:$0xff]
    %v1651 = vld [vmem:[#allocation10 + $0x208] sm:$0xff]
    %v1652 = vld [vmem:[#allocation10 + $0x210] sm:$0xf]
    %v1653 = vld [vmem:[#allocation10 + $0x214] sm:$0xff]
    %v1654 = vld [vmem:[#allocation10 + $0x21c] sm:$0xff]
    %v1655 = vld [vmem:[#allocation10 + $0x224] sm:$0xff]
    %v1656 = vld [vmem:[#allocation10 + $0x22c] sm:$0xf]
    %v1657 = vld [vmem:[#allocation10 + $0x230] sm:$0xff]
    %v1658 = vld [vmem:[#allocation10 + $0x238] sm:$0xff]
    %v1659 = vld [vmem:[#allocation10 + $0x240] sm:$0xff]
    %v1660 = vld [vmem:[#allocation10 + $0x248] sm:$0xf]
    %v1661 = vld [vmem:[#allocation10 + $0x24c] sm:$0xff]
    %v1662 = vld [vmem:[#allocation10 + $0x254] sm:$0xff]
    %v1663 = vld [vmem:[#allocation10 + $0x25c] sm:$0xff]
    %v1664 = vld [vmem:[#allocation10 + $0x264] sm:$0xf]
    %v1665 = vld [vmem:[#allocation10 + $0x268] sm:$0xff]
    %v1666 = vld [vmem:[#allocation10 + $0x270] sm:$0xff]
    %v1667 = vld [vmem:[#allocation10 + $0x278] sm:$0xff]
    %v1668 = vld [vmem:[#allocation10 + $0x280] sm:$0xf]
    %v1669 = vld [vmem:[#allocation10 + $0x284] sm:$0xff]
    %v1670 = vld [vmem:[#allocation10 + $0x28c] sm:$0xff]
    %v1671 = vld [vmem:[#allocation10 + $0x294] sm:$0xff]
    %v1672 = vld [vmem:[#allocation10 + $0x29c] sm:$0xf]
    %v1673 = vld [vmem:[#allocation10 + $0x2a0] sm:$0xff]
    %v1674 = vld [vmem:[#allocation10 + $0x2a8] sm:$0xff]
    %v1675 = vld [vmem:[#allocation10 + $0x2b0] sm:$0xff]
    %v1676 = vld [vmem:[#allocation10 + $0x2b8] sm:$0xf]
    %v1677 = vld [vmem:[#allocation10 + $0x2bc] sm:$0xff]
    %v1678 = vld [vmem:[#allocation10 + $0x2c4] sm:$0xff]
    %v1679 = vld [vmem:[#allocation10 + $0x2cc] sm:$0xff]
    %v1680 = vld [vmem:[#allocation10 + $0x2d4] sm:$0xf]
    %v1681 = vld [vmem:[#allocation10 + $0x2d8] sm:$0xff]
    %v1682 = vld [vmem:[#allocation10 + $0x2e0] sm:$0xff]
    %v1683 = vld [vmem:[#allocation10 + $0x2e8] sm:$0xff]
    %v1684 = vld [vmem:[#allocation10 + $0x2f0] sm:$0xf]
    %v1685 = vld [vmem:[#allocation10 + $0x2f4] sm:$0xff]
    %v1686 = vld [vmem:[#allocation10 + $0x2fc] sm:$0xff]
    %v1687 = vld [vmem:[#allocation10 + $0x304] sm:$0xff]
    %v1688 = vld [vmem:[#allocation10 + $0x30c] sm:$0xf]
    %v1689 = vld [vmem:[#allocation10 + $0x310] sm:$0xff]
    %v1690 = vld [vmem:[#allocation10 + $0x318] sm:$0xff]
    %v1691 = vld [vmem:[#allocation10 + $0x320] sm:$0xff]
    %v1692 = vld [vmem:[#allocation10 + $0x328] sm:$0xf]
    %v1693 = vld [vmem:[#allocation10 + $0x32c] sm:$0xff]
    %v1694 = vld [vmem:[#allocation10 + $0x334] sm:$0xff]
    %v1695 = vld [vmem:[#allocation10 + $0x33c] sm:$0xff]
    %v1696 = vld [vmem:[#allocation10 + $0x344] sm:$0xf]
    %v1697 = vld [vmem:[#allocation10 + $0x348] sm:$0xff]
    %v1698 = vld [vmem:[#allocation10 + $0x350] sm:$0xff]
    %v1699 = vld [vmem:[#allocation10 + $0x358] sm:$0xff]
    %v1700 = vld [vmem:[#allocation10 + $0x360] sm:$0xf]
    %v1701 = vld [vmem:[#allocation10 + $0x364] sm:$0xff]
    %v1702 = vld [vmem:[#allocation10 + $0x36c] sm:$0xff]
    %v1703 = vld [vmem:[#allocation10 + $0x374] sm:$0xff]
    %v1704 = vld [vmem:[#allocation10 + $0x37c] sm:$0xf]
    %v1705 = vld [vmem:[#allocation11] sm:$0xff]
    %v1707 = vperm.slane %v1705, 0
    %v1708 = vperm.slane %v1705, 1
    %v1709 = vperm.slane %v1705, 2
    %v1710 = vperm.slane %v1705, 3
    %v1711 = vperm.slane %v1705, 4
    %v1712 = vperm.slane %v1705, 5
    %v1713 = vperm.slane %v1705, 6
    %v1849 = vunpack.c.l.b16 %v1577
    %v1850 = vunpack.c.h.b16 %v1577
    %v1851 = vunpack.c.l.b16 %v1578
    %v1852 = vunpack.c.h.b16 %v1578
    %v1853 = vunpack.c.l.b16 %v1579
    %v1854 = vunpack.c.h.b16 %v1579
    %v1855 = vunpack.c.l.b16 %v1580
    %v1856 = vunpack.c.l.b16 %v1581
    %v1857 = vunpack.c.h.b16 %v1581
    %v1858 = vunpack.c.l.b16 %v1582
    %v1859 = vunpack.c.h.b16 %v1582
    %v1860 = vunpack.c.l.b16 %v1583
    %v1861 = vunpack.c.h.b16 %v1583
    %v1862 = vunpack.c.l.b16 %v1584
    %v1863 = vunpack.c.l.b16 %v1585
    %v1864 = vunpack.c.h.b16 %v1585
    %v1865 = vunpack.c.l.b16 %v1586
    %v1866 = vunpack.c.h.b16 %v1586
    %v1867 = vunpack.c.l.b16 %v1587
    %v1868 = vunpack.c.h.b16 %v1587
    %v1869 = vunpack.c.l.b16 %v1588
    %v1870 = vunpack.c.l.b16 %v1589
    %v1871 = vunpack.c.h.b16 %v1589
    %v1872 = vunpack.c.l.b16 %v1590
    %v1873 = vunpack.c.h.b16 %v1590
    %v1874 = vunpack.c.l.b16 %v1591
    %v1875 = vunpack.c.h.b16 %v1591
    %v1876 = vunpack.c.l.b16 %v1592
    %v1877 = vunpack.c.l.b16 %v1593
    %v1878 = vunpack.c.h.b16 %v1593
    %v1879 = vunpack.c.l.b16 %v1594
    %v1880 = vunpack.c.h.b16 %v1594
    %v1881 = vunpack.c.l.b16 %v1595
    %v1882 = vunpack.c.h.b16 %v1595
    %v1883 = vunpack.c.l.b16 %v1596
    %v1884 = vunpack.c.l.b16 %v1597
    %v1885 = vunpack.c.h.b16 %v1597
    %v1886 = vunpack.c.l.b16 %v1598
    %v1887 = vunpack.c.h.b16 %v1598
    %v1888 = vunpack.c.l.b16 %v1599
    %v1889 = vunpack.c.h.b16 %v1599
    %v1890 = vunpack.c.l.b16 %v1600
    %v1891 = vunpack.c.l.b16 %v1601
    %v1892 = vunpack.c.h.b16 %v1601
    %v1893 = vunpack.c.l.b16 %v1602
    %v1894 = vunpack.c.h.b16 %v1602
    %v1895 = vunpack.c.l.b16 %v1603
    %v1896 = vunpack.c.h.b16 %v1603
    %v1897 = vunpack.c.l.b16 %v1604
    %v1898 = vunpack.c.l.b16 %v1605
    %v1899 = vunpack.c.h.b16 %v1605
    %v1900 = vunpack.c.l.b16 %v1606
    %v1901 = vunpack.c.h.b16 %v1606
    %v1902 = vunpack.c.l.b16 %v1607
    %v1903 = vunpack.c.h.b16 %v1607
    %v1904 = vunpack.c.l.b16 %v1608
    %v1905 = vunpack.c.l.b16 %v1609
    %v1906 = vunpack.c.h.b16 %v1609
    %v1907 = vunpack.c.l.b16 %v1610
    %v1908 = vunpack.c.h.b16 %v1610
    %v1909 = vunpack.c.l.b16 %v1611
    %v1910 = vunpack.c.h.b16 %v1611
    %v1911 = vunpack.c.l.b16 %v1612
    %v1912 = vunpack.c.l.b16 %v1613
    %v1913 = vunpack.c.h.b16 %v1613
    %v1914 = vunpack.c.l.b16 %v1614
    %v1915 = vunpack.c.h.b16 %v1614
    %v1916 = vunpack.c.l.b16 %v1615
    %v1917 = vunpack.c.h.b16 %v1615
    %v1918 = vunpack.c.l.b16 %v1616
    %v1919 = vunpack.c.l.b16 %v1617
    %v1920 = vunpack.c.h.b16 %v1617
    %v1921 = vunpack.c.l.b16 %v1618
    %v1922 = vunpack.c.h.b16 %v1618
    %v1923 = vunpack.c.l.b16 %v1619
    %v1924 = vunpack.c.h.b16 %v1619
    %v1925 = vunpack.c.l.b16 %v1620
    %v1926 = vunpack.c.l.b16 %v1621
    %v1927 = vunpack.c.h.b16 %v1621
    %v1928 = vunpack.c.l.b16 %v1622
    %v1929 = vunpack.c.h.b16 %v1622
    %v1930 = vunpack.c.l.b16 %v1623
    %v1931 = vunpack.c.h.b16 %v1623
    %v1932 = vunpack.c.l.b16 %v1624
    %v1933 = vunpack.c.l.b16 %v1625
    %v1934 = vunpack.c.h.b16 %v1625
    %v1935 = vunpack.c.l.b16 %v1626
    %v1936 = vunpack.c.h.b16 %v1626
    %v1937 = vunpack.c.l.b16 %v1627
    %v1938 = vunpack.c.h.b16 %v1627
    %v1939 = vunpack.c.l.b16 %v1628
    %v1940 = vunpack.c.l.b16 %v1629
    %v1941 = vunpack.c.h.b16 %v1629
    %v1942 = vunpack.c.l.b16 %v1630
    %v1943 = vunpack.c.h.b16 %v1630
    %v1944 = vunpack.c.l.b16 %v1631
    %v1945 = vunpack.c.h.b16 %v1631
    %v1946 = vunpack.c.l.b16 %v1632
    %v1947 = vunpack.c.l.b16 %v1633
    %v1948 = vunpack.c.h.b16 %v1633
    %v1949 = vunpack.c.l.b16 %v1634
    %v1950 = vunpack.c.h.b16 %v1634
    %v1951 = vunpack.c.l.b16 %v1635
    %v1952 = vunpack.c.h.b16 %v1635
    %v1953 = vunpack.c.l.b16 %v1636
    %v1954 = vunpack.c.l.b16 %v1637
    %v1955 = vunpack.c.h.b16 %v1637
    %v1956 = vunpack.c.l.b16 %v1638
    %v1957 = vunpack.c.h.b16 %v1638
    %v1958 = vunpack.c.l.b16 %v1639
    %v1959 = vunpack.c.h.b16 %v1639
    %v1960 = vunpack.c.l.b16 %v1640
    %v1961 = vunpack.c.l.b16 %v1641
    %v1962 = vunpack.c.h.b16 %v1641
    %v1963 = vunpack.c.l.b16 %v1642
    %v1964 = vunpack.c.h.b16 %v1642
    %v1965 = vunpack.c.l.b16 %v1643
    %v1966 = vunpack.c.h.b16 %v1643
    %v1967 = vunpack.c.l.b16 %v1644
    %v1968 = vunpack.c.l.b16 %v1645
    %v1969 = vunpack.c.h.b16 %v1645
    %v1970 = vunpack.c.l.b16 %v1646
    %v1971 = vunpack.c.h.b16 %v1646
    %v1972 = vunpack.c.l.b16 %v1647
    %v1973 = vunpack.c.h.b16 %v1647
    %v1974 = vunpack.c.l.b16 %v1648
    %v1975 = vunpack.c.l.b16 %v1649
    %v1976 = vunpack.c.h.b16 %v1649
    %v1977 = vunpack.c.l.b16 %v1650
    %v1978 = vunpack.c.h.b16 %v1650
    %v1979 = vunpack.c.l.b16 %v1651
    %v1980 = vunpack.c.h.b16 %v1651
    %v1981 = vunpack.c.l.b16 %v1652
    %v1982 = vunpack.c.l.b16 %v1653
    %v1983 = vunpack.c.h.b16 %v1653
    %v1984 = vunpack.c.l.b16 %v1654
    %v1985 = vunpack.c.h.b16 %v1654
    %v1986 = vunpack.c.l.b16 %v1655
    %v1987 = vunpack.c.h.b16 %v1655
    %v1988 = vunpack.c.l.b16 %v1656
    %v1989 = vunpack.c.l.b16 %v1657
    %v1990 = vunpack.c.h.b16 %v1657
    %v1991 = vunpack.c.l.b16 %v1658
    %v1992 = vunpack.c.h.b16 %v1658
    %v1993 = vunpack.c.l.b16 %v1659
    %v1994 = vunpack.c.h.b16 %v1659
    %v1995 = vunpack.c.l.b16 %v1660
    %v1996 = vunpack.c.l.b16 %v1661
    %v1997 = vunpack.c.h.b16 %v1661
    %v1998 = vunpack.c.l.b16 %v1662
    %v1999 = vunpack.c.h.b16 %v1662
    %v2000 = vunpack.c.l.b16 %v1663
    %v2001 = vunpack.c.h.b16 %v1663
    %v2002 = vunpack.c.l.b16 %v1664
    %v2003 = vunpack.c.l.b16 %v1665
    %v2004 = vunpack.c.h.b16 %v1665
    %v2005 = vunpack.c.l.b16 %v1666
    %v2006 = vunpack.c.h.b16 %v1666
    %v2007 = vunpack.c.l.b16 %v1667
    %v2008 = vunpack.c.h.b16 %v1667
    %v2009 = vunpack.c.l.b16 %v1668
    %v2010 = vunpack.c.l.b16 %v1669
    %v2011 = vunpack.c.h.b16 %v1669
    %v2012 = vunpack.c.l.b16 %v1670
    %v2013 = vunpack.c.h.b16 %v1670
    %v2014 = vunpack.c.l.b16 %v1671
    %v2015 = vunpack.c.h.b16 %v1671
    %v2016 = vunpack.c.l.b16 %v1672
    %v2017 = vunpack.c.l.b16 %v1673
    %v2018 = vunpack.c.h.b16 %v1673
    %v2019 = vunpack.c.l.b16 %v1674
    %v2020 = vunpack.c.h.b16 %v1674
    %v2021 = vunpack.c.l.b16 %v1675
    %v2022 = vunpack.c.h.b16 %v1675
    %v2023 = vunpack.c.l.b16 %v1676
    %v2024 = vunpack.c.l.b16 %v1677
    %v2025 = vunpack.c.h.b16 %v1677
    %v2026 = vunpack.c.l.b16 %v1678
    %v2027 = vunpack.c.h.b16 %v1678
    %v2028 = vunpack.c.l.b16 %v1679
    %v2029 = vunpack.c.h.b16 %v1679
    %v2030 = vunpack.c.l.b16 %v1680
    %v2031 = vunpack.c.l.b16 %v1681
    %v2032 = vunpack.c.h.b16 %v1681
    %v2033 = vunpack.c.l.b16 %v1682
    %v2034 = vunpack.c.h.b16 %v1682
    %v2035 = vunpack.c.l.b16 %v1683
    %v2036 = vunpack.c.h.b16 %v1683
    %v2037 = vunpack.c.l.b16 %v1684
    %v2038 = vunpack.c.l.b16 %v1685
    %v2039 = vunpack.c.h.b16 %v1685
    %v2040 = vunpack.c.l.b16 %v1686
    %v2041 = vunpack.c.h.b16 %v1686
    %v2042 = vunpack.c.l.b16 %v1687
    %v2043 = vunpack.c.h.b16 %v1687
    %v2044 = vunpack.c.l.b16 %v1688
    %v2045 = vunpack.c.l.b16 %v1689
    %v2046 = vunpack.c.h.b16 %v1689
    %v2047 = vunpack.c.l.b16 %v1690
    %v2048 = vunpack.c.h.b16 %v1690
    %v2049 = vunpack.c.l.b16 %v1691
    %v2050 = vunpack.c.h.b16 %v1691
    %v2051 = vunpack.c.l.b16 %v1692
    %v2052 = vunpack.c.l.b16 %v1693
    %v2053 = vunpack.c.h.b16 %v1693
    %v2054 = vunpack.c.l.b16 %v1694
    %v2055 = vunpack.c.h.b16 %v1694
    %v2056 = vunpack.c.l.b16 %v1695
    %v2057 = vunpack.c.h.b16 %v1695
    %v2058 = vunpack.c.l.b16 %v1696
    %v2059 = vunpack.c.l.b16 %v1697
    %v2060 = vunpack.c.h.b16 %v1697
    %v2061 = vunpack.c.l.b16 %v1698
    %v2062 = vunpack.c.h.b16 %v1698
    %v2063 = vunpack.c.l.b16 %v1699
    %v2064 = vunpack.c.h.b16 %v1699
    %v2065 = vunpack.c.l.b16 %v1700
    %v2066 = vunpack.c.l.b16 %v1701
    %v2067 = vunpack.c.h.b16 %v1701
    %v2068 = vunpack.c.l.b16 %v1702
    %v2069 = vunpack.c.h.b16 %v1702
    %v2070 = vunpack.c.l.b16 %v1703
    %v2071 = vunpack.c.h.b16 %v1703
    %v2072 = vunpack.c.l.b16 %v1704
    %v2073 = vpack.c.b16 %v1856, %v1849
    %v2074 = vpack.c.b16 %v1857, %v1850
    %v2075 = vpack.c.b16 %v1858, %v1851
    %v2076 = vpack.c.b16 %v1859, %v1852
    %v2077 = vpack.c.b16 %v1860, %v1853
    %v2078 = vpack.c.b16 %v1861, %v1854
    %v2079 = vpack.c.b16 %v1862, %v1855
    %v2080 = vpack.c.b16 %v1870, %v1863
    %v2081 = vpack.c.b16 %v1871, %v1864
    %v2082 = vpack.c.b16 %v1872, %v1865
    %v2083 = vpack.c.b16 %v1873, %v1866
    %v2084 = vpack.c.b16 %v1874, %v1867
    %v2085 = vpack.c.b16 %v1875, %v1868
    %v2086 = vpack.c.b16 %v1876, %v1869
    %v2087 = vpack.c.b16 %v1884, %v1877
    %v2088 = vpack.c.b16 %v1885, %v1878
    %v2089 = vpack.c.b16 %v1886, %v1879
    %v2090 = vpack.c.b16 %v1887, %v1880
    %v2091 = vpack.c.b16 %v1888, %v1881
    %v2092 = vpack.c.b16 %v1889, %v1882
    %v2093 = vpack.c.b16 %v1890, %v1883
    %v2094 = vpack.c.b16 %v1898, %v1891
    %v2095 = vpack.c.b16 %v1899, %v1892
    %v2096 = vpack.c.b16 %v1900, %v1893
    %v2097 = vpack.c.b16 %v1901, %v1894
    %v2098 = vpack.c.b16 %v1902, %v1895
    %v2099 = vpack.c.b16 %v1903, %v1896
    %v2100 = vpack.c.b16 %v1904, %v1897
    %v2101 = vpack.c.b16 %v1912, %v1905
    %v2102 = vpack.c.b16 %v1913, %v1906
    %v2103 = vpack.c.b16 %v1914, %v1907
    %v2104 = vpack.c.b16 %v1915, %v1908
    %v2105 = vpack.c.b16 %v1916, %v1909
    %v2106 = vpack.c.b16 %v1917, %v1910
    %v2107 = vpack.c.b16 %v1918, %v1911
    %v2108 = vpack.c.b16 %v1926, %v1919
    %v2109 = vpack.c.b16 %v1927, %v1920
    %v2110 = vpack.c.b16 %v1928, %v1921
    %v2111 = vpack.c.b16 %v1929, %v1922
    %v2112 = vpack.c.b16 %v1930, %v1923
    %v2113 = vpack.c.b16 %v1931, %v1924
    %v2114 = vpack.c.b16 %v1932, %v1925
    %v2115 = vpack.c.b16 %v1940, %v1933
    %v2116 = vpack.c.b16 %v1941, %v1934
    %v2117 = vpack.c.b16 %v1942, %v1935
    %v2118 = vpack.c.b16 %v1943, %v1936
    %v2119 = vpack.c.b16 %v1944, %v1937
    %v2120 = vpack.c.b16 %v1945, %v1938
    %v2121 = vpack.c.b16 %v1946, %v1939
    %v2122 = vpack.c.b16 %v1954, %v1947
    %v2123 = vpack.c.b16 %v1955, %v1948
    %v2124 = vpack.c.b16 %v1956, %v1949
    %v2125 = vpack.c.b16 %v1957, %v1950
    %v2126 = vpack.c.b16 %v1958, %v1951
    %v2127 = vpack.c.b16 %v1959, %v1952
    %v2128 = vpack.c.b16 %v1960, %v1953
    %v2129 = vpack.c.b16 %v1968, %v1961
    %v2130 = vpack.c.b16 %v1969, %v1962
    %v2131 = vpack.c.b16 %v1970, %v1963
    %v2132 = vpack.c.b16 %v1971, %v1964
    %v2133 = vpack.c.b16 %v1972, %v1965
    %v2134 = vpack.c.b16 %v1973, %v1966
    %v2135 = vpack.c.b16 %v1974, %v1967
    %v2136 = vpack.c.b16 %v1982, %v1975
    %v2137 = vpack.c.b16 %v1983, %v1976
    %v2138 = vpack.c.b16 %v1984, %v1977
    %v2139 = vpack.c.b16 %v1985, %v1978
    %v2140 = vpack.c.b16 %v1986, %v1979
    %v2141 = vpack.c.b16 %v1987, %v1980
    %v2142 = vpack.c.b16 %v1988, %v1981
    %v2143 = vpack.c.b16 %v1996, %v1989
    %v2144 = vpack.c.b16 %v1997, %v1990
    %v2145 = vpack.c.b16 %v1998, %v1991
    %v2146 = vpack.c.b16 %v1999, %v1992
    %v2147 = vpack.c.b16 %v2000, %v1993
    %v2148 = vpack.c.b16 %v2001, %v1994
    %v2149 = vpack.c.b16 %v2002, %v1995
    %v2150 = vpack.c.b16 %v2010, %v2003
    %v2151 = vpack.c.b16 %v2011, %v2004
    %v2152 = vpack.c.b16 %v2012, %v2005
    %v2153 = vpack.c.b16 %v2013, %v2006
    %v2154 = vpack.c.b16 %v2014, %v2007
    %v2155 = vpack.c.b16 %v2015, %v2008
    %v2156 = vpack.c.b16 %v2016, %v2009
    %v2157 = vpack.c.b16 %v2024, %v2017
    %v2158 = vpack.c.b16 %v2025, %v2018
    %v2159 = vpack.c.b16 %v2026, %v2019
    %v2160 = vpack.c.b16 %v2027, %v2020
    %v2161 = vpack.c.b16 %v2028, %v2021
    %v2162 = vpack.c.b16 %v2029, %v2022
    %v2163 = vpack.c.b16 %v2030, %v2023
    %v2164 = vpack.c.b16 %v2038, %v2031
    %v2165 = vpack.c.b16 %v2039, %v2032
    %v2166 = vpack.c.b16 %v2040, %v2033
    %v2167 = vpack.c.b16 %v2041, %v2034
    %v2168 = vpack.c.b16 %v2042, %v2035
    %v2169 = vpack.c.b16 %v2043, %v2036
    %v2170 = vpack.c.b16 %v2044, %v2037
    %v2171 = vpack.c.b16 %v2052, %v2045
    %v2172 = vpack.c.b16 %v2053, %v2046
    %v2173 = vpack.c.b16 %v2054, %v2047
    %v2174 = vpack.c.b16 %v2055, %v2048
    %v2175 = vpack.c.b16 %v2056, %v2049
    %v2176 = vpack.c.b16 %v2057, %v2050
    %v2177 = vpack.c.b16 %v2058, %v2051
    %v2178 = vpack.c.b16 %v2066, %v2059
    %v2179 = vpack.c.b16 %v2067, %v2060
    %v2180 = vpack.c.b16 %v2068, %v2061
    %v2181 = vpack.c.b16 %v2069, %v2062
    %v2182 = vpack.c.b16 %v2070, %v2063
    %v2183 = vpack.c.b16 %v2071, %v2064
    %v2184 = vpack.c.b16 %v2072, %v2065
    %2297 = vmatpush.bf16.msra.mxu0 %v2122
    %2298 = vmatpush.bf16.msra.mxu0 %v2115
    %2299 = vmatpush.bf16.msra.mxu0 %v2108
    %2300 = vmatpush.bf16.msra.mxu0 %v2101
    %2301 = vmatpush.bf16.msra.mxu0 %v2094
    %2302 = vmatpush.bf16.msra.mxu0 %v2087
    %2303 = vmatpush.bf16.msra.mxu0 %v2080
    %2304 = vmatpush.bf16.msra.mxu0 %v2073
    %2305 = vmatmul.bf16.gmra.mxu0 %v1569
    %v2306 = vpop.f32.mrf.mxu0
    %v2307 = vadd.f32 %v1707, %v2306
    %v2308 = vpop.f32.mrf.mxu0
    %v2309 = vadd.f32 %v1707, %v2308
    %2310 = vmatmul.bf16.gmra.mxu0 %v1571
    %v2311 = vpop.f32.mrf.mxu0
    %v2312 = vadd.f32 %v1707, %v2311
    %v2313 = vpop.f32.mrf.mxu0
    %v2314 = vadd.f32 %v1707, %v2313
    %2315 = vmatmul.bf16.gmra.mxu0 %v1573
    %v2316 = vpop.f32.mrf.mxu0
    %v2317 = vadd.f32 %v1707, %v2316
    %v2318 = vpop.f32.mrf.mxu0
    %v2319 = vadd.f32 %v1707, %v2318
    %2320 = vmatmul.bf16.gmra.mxu0 %v1575
    %v2321 = vpop.f32.mrf.mxu0
    %v2322 = vadd.f32 %v1707, %v2321
    %v2323 = vpop.f32.mrf.mxu0
    %v2324 = vadd.f32 %v1707, %v2323
    %2325 = vdwg.mxu0
    %2326 = vmatpush.bf16.msra.mxu0 %v2178
    %2327 = vmatpush.bf16.msra.mxu0 %v2171
    %2328 = vmatpush.bf16.msra.mxu0 %v2164
    %2329 = vmatpush.bf16.msra.mxu0 %v2157
    %2330 = vmatpush.bf16.msra.mxu0 %v2150
    %2331 = vmatpush.bf16.msra.mxu0 %v2143
    %2332 = vmatpush.bf16.msra.mxu0 %v2136
    %2333 = vmatpush.bf16.msra.mxu0 %v2129
    %2334 = vmatmul.bf16.gmra.mxu0 %v1570
    %v2335 = vpop.f32.mrf.mxu0
    %v2336 = vadd.f32 %v2307, %v2335
    %v2337 = vpop.f32.mrf.mxu0
    %v2338 = vadd.f32 %v2309, %v2337
    %2339 = vmatmul.bf16.gmra.mxu0 %v1572
    %v2340 = vpop.f32.mrf.mxu0
    %v2341 = vadd.f32 %v2312, %v2340
    %v2342 = vpop.f32.mrf.mxu0
    %v2343 = vadd.f32 %v2314, %v2342
    %2344 = vmatmul.bf16.gmra.mxu0 %v1574
    %v2345 = vpop.f32.mrf.mxu0
    %v2346 = vadd.f32 %v2317, %v2345
    %v2347 = vpop.f32.mrf.mxu0
    %v2348 = vadd.f32 %v2319, %v2347
    %2349 = vmatmul.bf16.gmra.mxu0 %v1576
    %v2350 = vpop.f32.mrf.mxu0
    %v2351 = vadd.f32 %v2322, %v2350
    %v2352 = vpop.f32.mrf.mxu0
    %v2353 = vadd.f32 %v2324, %v2352
    %2354 = vdwg.mxu0
    %2355 = vmatpush.bf16.msra.mxu0 %v2123
    %2356 = vmatpush.bf16.msra.mxu0 %v2116
    %2357 = vmatpush.bf16.msra.mxu0 %v2109
    %2358 = vmatpush.bf16.msra.mxu0 %v2102
    %2359 = vmatpush.bf16.msra.mxu0 %v2095
    %2360 = vmatpush.bf16.msra.mxu0 %v2088
    %2361 = vmatpush.bf16.msra.mxu0 %v2081
    %2362 = vmatpush.bf16.msra.mxu0 %v2074
    %2363 = vmatmul.bf16.gmra.mxu0 %v1569
    %v2364 = vpop.f32.mrf.mxu0
    %v2365 = vadd.f32 %v1708, %v2364
    %v2366 = vpop.f32.mrf.mxu0
    %v2367 = vadd.f32 %v1708, %v2366
    %2368 = vmatmul.bf16.gmra.mxu0 %v1571
    %v2369 = vpop.f32.mrf.mxu0
    %v2370 = vadd.f32 %v1708, %v2369
    %v2371 = vpop.f32.mrf.mxu0
    %v2372 = vadd.f32 %v1708, %v2371
    %2373 = vmatmul.bf16.gmra.mxu0 %v1573
    %v2374 = vpop.f32.mrf.mxu0
    %v2375 = vadd.f32 %v1708, %v2374
    %v2376 = vpop.f32.mrf.mxu0
    %v2377 = vadd.f32 %v1708, %v2376
    %2378 = vmatmul.bf16.gmra.mxu0 %v1575
    %v2379 = vpop.f32.mrf.mxu0
    %v2380 = vadd.f32 %v1708, %v2379
    %v2381 = vpop.f32.mrf.mxu0
    %v2382 = vadd.f32 %v1708, %v2381
    %2383 = vdwg.mxu0
    %2384 = vmatpush.bf16.msra.mxu0 %v2179
    %2385 = vmatpush.bf16.msra.mxu0 %v2172
    %2386 = vmatpush.bf16.msra.mxu0 %v2165
    %2387 = vmatpush.bf16.msra.mxu0 %v2158
    %2388 = vmatpush.bf16.msra.mxu0 %v2151
    %2389 = vmatpush.bf16.msra.mxu0 %v2144
    %2390 = vmatpush.bf16.msra.mxu0 %v2137
    %2391 = vmatpush.bf16.msra.mxu0 %v2130
    %2392 = vmatmul.bf16.gmra.mxu0 %v1570
    %v2393 = vpop.f32.mrf.mxu0
    %v2394 = vadd.f32 %v2365, %v2393
    %v2395 = vpop.f32.mrf.mxu0
    %v2396 = vadd.f32 %v2367, %v2395
    %2397 = vmatmul.bf16.gmra.mxu0 %v1572
    %v2398 = vpop.f32.mrf.mxu0
    %v2399 = vadd.f32 %v2370, %v2398
    %v2400 = vpop.f32.mrf.mxu0
    %v2401 = vadd.f32 %v2372, %v2400
    %2402 = vmatmul.bf16.gmra.mxu0 %v1574
    %v2403 = vpop.f32.mrf.mxu0
    %v2404 = vadd.f32 %v2375, %v2403
    %v2405 = vpop.f32.mrf.mxu0
    %v2406 = vadd.f32 %v2377, %v2405
    %2407 = vmatmul.bf16.gmra.mxu0 %v1576
    %v2408 = vpop.f32.mrf.mxu0
    %v2409 = vadd.f32 %v2380, %v2408
    %v2410 = vpop.f32.mrf.mxu0
    %v2411 = vadd.f32 %v2382, %v2410
    %2412 = vdwg.mxu0
    %2413 = vmatpush.bf16.msra.mxu0 %v2124
    %2414 = vmatpush.bf16.msra.mxu0 %v2117
    %2415 = vmatpush.bf16.msra.mxu0 %v2110
    %2416 = vmatpush.bf16.msra.mxu0 %v2103
    %2417 = vmatpush.bf16.msra.mxu0 %v2096
    %2418 = vmatpush.bf16.msra.mxu0 %v2089
    %2419 = vmatpush.bf16.msra.mxu0 %v2082
    %2420 = vmatpush.bf16.msra.mxu0 %v2075
    %2421 = vmatmul.bf16.gmra.mxu0 %v1569
    %v2422 = vpop.f32.mrf.mxu0
    %v2423 = vadd.f32 %v1709, %v2422
    %v2424 = vpop.f32.mrf.mxu0
    %v2425 = vadd.f32 %v1709, %v2424
    %2426 = vmatmul.bf16.gmra.mxu0 %v1571
    %v2427 = vpop.f32.mrf.mxu0
    %v2428 = vadd.f32 %v1709, %v2427
    %v2429 = vpop.f32.mrf.mxu0
    %v2430 = vadd.f32 %v1709, %v2429
    %2431 = vmatmul.bf16.gmra.mxu0 %v1573
    %v2432 = vpop.f32.mrf.mxu0
    %v2433 = vadd.f32 %v1709, %v2432
    %v2434 = vpop.f32.mrf.mxu0
    %v2435 = vadd.f32 %v1709, %v2434
    %2436 = vmatmul.bf16.gmra.mxu0 %v1575
    %v2437 = vpop.f32.mrf.mxu0
    %v2438 = vadd.f32 %v1709, %v2437
    %v2439 = vpop.f32.mrf.mxu0
    %v2440 = vadd.f32 %v1709, %v2439
    %2441 = vdwg.mxu0
    %2442 = vmatpush.bf16.msra.mxu0 %v2180
    %2443 = vmatpush.bf16.msra.mxu0 %v2173
    %2444 = vmatpush.bf16.msra.mxu0 %v2166
    %2445 = vmatpush.bf16.msra.mxu0 %v2159
    %2446 = vmatpush.bf16.msra.mxu0 %v2152
    %2447 = vmatpush.bf16.msra.mxu0 %v2145
    %2448 = vmatpush.bf16.msra.mxu0 %v2138
    %2449 = vmatpush.bf16.msra.mxu0 %v2131
    %2450 = vmatmul.bf16.gmra.mxu0 %v1570
    %v2451 = vpop.f32.mrf.mxu0
    %v2452 = vadd.f32 %v2423, %v2451
    %v2453 = vpop.f32.mrf.mxu0
    %v2454 = vadd.f32 %v2425, %v2453
    %2455 = vmatmul.bf16.gmra.mxu0 %v1572
    %v2456 = vpop.f32.mrf.mxu0
    %v2457 = vadd.f32 %v2428, %v2456
    %v2458 = vpop.f32.mrf.mxu0
    %v2459 = vadd.f32 %v2430, %v2458
    %2460 = vmatmul.bf16.gmra.mxu0 %v1574
    %v2461 = vpop.f32.mrf.mxu0
    %v2462 = vadd.f32 %v2433, %v2461
    %v2463 = vpop.f32.mrf.mxu0
    %v2464 = vadd.f32 %v2435, %v2463
    %2465 = vmatmul.bf16.gmra.mxu0 %v1576
    %v2466 = vpop.f32.mrf.mxu0
    %v2467 = vadd.f32 %v2438, %v2466
    %v2468 = vpop.f32.mrf.mxu0
    %v2469 = vadd.f32 %v2440, %v2468
    %2470 = vdwg.mxu0
    %2471 = vmatpush.bf16.msra.mxu0 %v2125
    %2472 = vmatpush.bf16.msra.mxu0 %v2118
    %2473 = vmatpush.bf16.msra.mxu0 %v2111
    %2474 = vmatpush.bf16.msra.mxu0 %v2104
    %2475 = vmatpush.bf16.msra.mxu0 %v2097
    %2476 = vmatpush.bf16.msra.mxu0 %v2090
    %2477 = vmatpush.bf16.msra.mxu0 %v2083
    %2478 = vmatpush.bf16.msra.mxu0 %v2076
    %2479 = vmatmul.bf16.gmra.mxu0 %v1569
    %v2480 = vpop.f32.mrf.mxu0
    %v2481 = vadd.f32 %v1710, %v2480
    %v2482 = vpop.f32.mrf.mxu0
    %v2483 = vadd.f32 %v1710, %v2482
    %2484 = vmatmul.bf16.gmra.mxu0 %v1571
    %v2485 = vpop.f32.mrf.mxu0
    %v2486 = vadd.f32 %v1710, %v2485
    %v2487 = vpop.f32.mrf.mxu0
    %v2488 = vadd.f32 %v1710, %v2487
    %2489 = vmatmul.bf16.gmra.mxu0 %v1573
    %v2490 = vpop.f32.mrf.mxu0
    %v2491 = vadd.f32 %v1710, %v2490
    %v2492 = vpop.f32.mrf.mxu0
    %v2493 = vadd.f32 %v1710, %v2492
    %2494 = vmatmul.bf16.gmra.mxu0 %v1575
    %v2495 = vpop.f32.mrf.mxu0
    %v2496 = vadd.f32 %v1710, %v2495
    %v2497 = vpop.f32.mrf.mxu0
    %v2498 = vadd.f32 %v1710, %v2497
    %2499 = vdwg.mxu0
    %2500 = vmatpush.bf16.msra.mxu0 %v2181
    %2501 = vmatpush.bf16.msra.mxu0 %v2174
    %2502 = vmatpush.bf16.msra.mxu0 %v2167
    %2503 = vmatpush.bf16.msra.mxu0 %v2160
    %2504 = vmatpush.bf16.msra.mxu0 %v2153
    %2505 = vmatpush.bf16.msra.mxu0 %v2146
    %2506 = vmatpush.bf16.msra.mxu0 %v2139
    %2507 = vmatpush.bf16.msra.mxu0 %v2132
    %2508 = vmatmul.bf16.gmra.mxu0 %v1570
    %v2509 = vpop.f32.mrf.mxu0
    %v2510 = vadd.f32 %v2481, %v2509
    %v2511 = vpop.f32.mrf.mxu0
    %v2512 = vadd.f32 %v2483, %v2511
    %2513 = vmatmul.bf16.gmra.mxu0 %v1572
    %v2514 = vpop.f32.mrf.mxu0
    %v2515 = vadd.f32 %v2486, %v2514
    %v2516 = vpop.f32.mrf.mxu0
    %v2517 = vadd.f32 %v2488, %v2516
    %2518 = vmatmul.bf16.gmra.mxu0 %v1574
    %v2519 = vpop.f32.mrf.mxu0
    %v2520 = vadd.f32 %v2491, %v2519
    %v2521 = vpop.f32.mrf.mxu0
    %v2522 = vadd.f32 %v2493, %v2521
    %2523 = vmatmul.bf16.gmra.mxu0 %v1576
    %v2524 = vpop.f32.mrf.mxu0
    %v2525 = vadd.f32 %v2496, %v2524
    %v2526 = vpop.f32.mrf.mxu0
    %v2527 = vadd.f32 %v2498, %v2526
    %2528 = vdwg.mxu0
    %2529 = vmatpush.bf16.msra.mxu0 %v2126
    %2530 = vmatpush.bf16.msra.mxu0 %v2119
    %2531 = vmatpush.bf16.msra.mxu0 %v2112
    %2532 = vmatpush.bf16.msra.mxu0 %v2105
    %2533 = vmatpush.bf16.msra.mxu0 %v2098
    %2534 = vmatpush.bf16.msra.mxu0 %v2091
    %2535 = vmatpush.bf16.msra.mxu0 %v2084
    %2536 = vmatpush.bf16.msra.mxu0 %v2077
    %2537 = vmatmul.bf16.gmra.mxu0 %v1569
    %v2538 = vpop.f32.mrf.mxu0
    %v2539 = vadd.f32 %v1711, %v2538
    %v2540 = vpop.f32.mrf.mxu0
    %v2541 = vadd.f32 %v1711, %v2540
    %2542 = vmatmul.bf16.gmra.mxu0 %v1571
    %v2543 = vpop.f32.mrf.mxu0
    %v2544 = vadd.f32 %v1711, %v2543
    %v2545 = vpop.f32.mrf.mxu0
    %v2546 = vadd.f32 %v1711, %v2545
    %2547 = vmatmul.bf16.gmra.mxu0 %v1573
    %v2548 = vpop.f32.mrf.mxu0
    %v2549 = vadd.f32 %v1711, %v2548
    %v2550 = vpop.f32.mrf.mxu0
    %v2551 = vadd.f32 %v1711, %v2550
    %2552 = vmatmul.bf16.gmra.mxu0 %v1575
    %v2553 = vpop.f32.mrf.mxu0
    %v2554 = vadd.f32 %v1711, %v2553
    %v2555 = vpop.f32.mrf.mxu0
    %v2556 = vadd.f32 %v1711, %v2555
    %2557 = vdwg.mxu0
    %2558 = vmatpush.bf16.msra.mxu0 %v2182
    %2559 = vmatpush.bf16.msra.mxu0 %v2175
    %2560 = vmatpush.bf16.msra.mxu0 %v2168
    %2561 = vmatpush.bf16.msra.mxu0 %v2161
    %2562 = vmatpush.bf16.msra.mxu0 %v2154
    %2563 = vmatpush.bf16.msra.mxu0 %v2147
    %2564 = vmatpush.bf16.msra.mxu0 %v2140
    %2565 = vmatpush.bf16.msra.mxu0 %v2133
    %2566 = vmatmul.bf16.gmra.mxu0 %v1570
    %v2567 = vpop.f32.mrf.mxu0
    %v2568 = vadd.f32 %v2539, %v2567
    %v2569 = vpop.f32.mrf.mxu0
    %v2570 = vadd.f32 %v2541, %v2569
    %2571 = vmatmul.bf16.gmra.mxu0 %v1572
    %v2572 = vpop.f32.mrf.mxu0
    %v2573 = vadd.f32 %v2544, %v2572
    %v2574 = vpop.f32.mrf.mxu0
    %v2575 = vadd.f32 %v2546, %v2574
    %2576 = vmatmul.bf16.gmra.mxu0 %v1574
    %v2577 = vpop.f32.mrf.mxu0
    %v2578 = vadd.f32 %v2549, %v2577
    %v2579 = vpop.f32.mrf.mxu0
    %v2580 = vadd.f32 %v2551, %v2579
    %2581 = vmatmul.bf16.gmra.mxu0 %v1576
    %v2582 = vpop.f32.mrf.mxu0
    %v2583 = vadd.f32 %v2554, %v2582
    %v2584 = vpop.f32.mrf.mxu0
    %v2585 = vadd.f32 %v2556, %v2584
    %2586 = vdwg.mxu0
    %2587 = vmatpush.bf16.msra.mxu0 %v2127
    %2588 = vmatpush.bf16.msra.mxu0 %v2120
    %2589 = vmatpush.bf16.msra.mxu0 %v2113
    %2590 = vmatpush.bf16.msra.mxu0 %v2106
    %2591 = vmatpush.bf16.msra.mxu0 %v2099
    %2592 = vmatpush.bf16.msra.mxu0 %v2092
    %2593 = vmatpush.bf16.msra.mxu0 %v2085
    %2594 = vmatpush.bf16.msra.mxu0 %v2078
    %2595 = vmatmul.bf16.gmra.mxu0 %v1569
    %v2596 = vpop.f32.mrf.mxu0
    %v2597 = vadd.f32 %v1712, %v2596
    %v2598 = vpop.f32.mrf.mxu0
    %v2599 = vadd.f32 %v1712, %v2598
    %2600 = vmatmul.bf16.gmra.mxu0 %v1571
    %v2601 = vpop.f32.mrf.mxu0
    %v2602 = vadd.f32 %v1712, %v2601
    %v2603 = vpop.f32.mrf.mxu0
    %v2604 = vadd.f32 %v1712, %v2603
    %2605 = vmatmul.bf16.gmra.mxu0 %v1573
    %v2606 = vpop.f32.mrf.mxu0
    %v2607 = vadd.f32 %v1712, %v2606
    %v2608 = vpop.f32.mrf.mxu0
    %v2609 = vadd.f32 %v1712, %v2608
    %2610 = vmatmul.bf16.gmra.mxu0 %v1575
    %v2611 = vpop.f32.mrf.mxu0
    %v2612 = vadd.f32 %v1712, %v2611
    %v2613 = vpop.f32.mrf.mxu0
    %v2614 = vadd.f32 %v1712, %v2613
    %2615 = vdwg.mxu0
    %2616 = vmatpush.bf16.msra.mxu0 %v2183
    %2617 = vmatpush.bf16.msra.mxu0 %v2176
    %2618 = vmatpush.bf16.msra.mxu0 %v2169
    %2619 = vmatpush.bf16.msra.mxu0 %v2162
    %2620 = vmatpush.bf16.msra.mxu0 %v2155
    %2621 = vmatpush.bf16.msra.mxu0 %v2148
    %2622 = vmatpush.bf16.msra.mxu0 %v2141
    %2623 = vmatpush.bf16.msra.mxu0 %v2134
    %2624 = vmatmul.bf16.gmra.mxu0 %v1570
    %v2625 = vpop.f32.mrf.mxu0
    %v2626 = vadd.f32 %v2597, %v2625
    %v2627 = vpop.f32.mrf.mxu0
    %v2628 = vadd.f32 %v2599, %v2627
    %2629 = vmatmul.bf16.gmra.mxu0 %v1572
    %v2630 = vpop.f32.mrf.mxu0
    %v2631 = vadd.f32 %v2602, %v2630
    %v2632 = vpop.f32.mrf.mxu0
    %v2633 = vadd.f32 %v2604, %v2632
    %2634 = vmatmul.bf16.gmra.mxu0 %v1574
    %v2635 = vpop.f32.mrf.mxu0
    %v2636 = vadd.f32 %v2607, %v2635
    %v2637 = vpop.f32.mrf.mxu0
    %v2638 = vadd.f32 %v2609, %v2637
    %2639 = vmatmul.bf16.gmra.mxu0 %v1576
    %v2640 = vpop.f32.mrf.mxu0
    %v2641 = vadd.f32 %v2612, %v2640
    %v2642 = vpop.f32.mrf.mxu0
    %v2643 = vadd.f32 %v2614, %v2642
    %2644 = vdwg.mxu0
    %2645 = vmatpush.bf16.msra.mxu0 %v2128
    %2646 = vmatpush.bf16.msra.mxu0 %v2121
    %2647 = vmatpush.bf16.msra.mxu0 %v2114
    %2648 = vmatpush.bf16.msra.mxu0 %v2107
    %2649 = vmatpush.bf16.msra.mxu0 %v2100
    %2650 = vmatpush.bf16.msra.mxu0 %v2093
    %2651 = vmatpush.bf16.msra.mxu0 %v2086
    %2652 = vmatpush.bf16.msra.mxu0 %v2079
    %2653 = vmatmul.bf16.gmra.mxu0 %v1569
    %v2654 = vpop.f32.mrf.mxu0
    %v2655 = vadd.f32 %v1713, %v2654
    %v2656 = vpop.f32.mrf.mxu0
    %v2657 = vadd.f32 %v1713, %v2656
    %2658 = vmatmul.bf16.gmra.mxu0 %v1571
    %v2659 = vpop.f32.mrf.mxu0
    %v2660 = vadd.f32 %v1713, %v2659
    %v2661 = vpop.f32.mrf.mxu0
    %v2662 = vadd.f32 %v1713, %v2661
    %2663 = vmatmul.bf16.gmra.mxu0 %v1573
    %v2664 = vpop.f32.mrf.mxu0
    %v2665 = vadd.f32 %v1713, %v2664
    %v2666 = vpop.f32.mrf.mxu0
    %v2667 = vadd.f32 %v1713, %v2666
    %2668 = vmatmul.bf16.gmra.mxu0 %v1575
    %v2669 = vpop.f32.mrf.mxu0
    %v2670 = vadd.f32 %v1713, %v2669
    %v2671 = vpop.f32.mrf.mxu0
    %v2672 = vadd.f32 %v1713, %v2671
    %2673 = vdwg.mxu0
    %2674 = vmatpush.bf16.msra.mxu0 %v2184
    %2675 = vmatpush.bf16.msra.mxu0 %v2177
    %2676 = vmatpush.bf16.msra.mxu0 %v2170
    %2677 = vmatpush.bf16.msra.mxu0 %v2163
    %2678 = vmatpush.bf16.msra.mxu0 %v2156
    %2679 = vmatpush.bf16.msra.mxu0 %v2149
    %2680 = vmatpush.bf16.msra.mxu0 %v2142
    %2681 = vmatpush.bf16.msra.mxu0 %v2135
    %2682 = vmatmul.bf16.gmra.mxu0 %v1570
    %v2683 = vpop.f32.mrf.mxu0
    %v2684 = vadd.f32 %v2655, %v2683
    %v2685 = vpop.f32.mrf.mxu0
    %v2686 = vadd.f32 %v2657, %v2685
    %2687 = vmatmul.bf16.gmra.mxu0 %v1572
    %v2688 = vpop.f32.mrf.mxu0
    %v2689 = vadd.f32 %v2660, %v2688
    %v2690 = vpop.f32.mrf.mxu0
    %v2691 = vadd.f32 %v2662, %v2690
    %2692 = vmatmul.bf16.gmra.mxu0 %v1574
    %v2693 = vpop.f32.mrf.mxu0
    %v2694 = vadd.f32 %v2665, %v2693
    %v2695 = vpop.f32.mrf.mxu0
    %v2696 = vadd.f32 %v2667, %v2695
    %2697 = vmatmul.bf16.gmra.mxu0 %v1576
    %v2698 = vpop.f32.mrf.mxu0
    %v2699 = vadd.f32 %v2670, %v2698
    %v2700 = vpop.f32.mrf.mxu0
    %v2701 = vadd.f32 %v2672, %v2700
    %2702 = vdwg.mxu0
    %v2703 = vtanh.pop %v2336
    %v2704 = vtanh.pop %v2394
    %v2705 = vtanh.pop %v2452
    %v2706 = vtanh.pop %v2510
    %v2707 = vtanh.pop %v2568
    %v2708 = vtanh.pop %v2626
    %v2709 = vtanh.pop %v2684
    %v2710 = vtanh.pop %v2338
    %v2711 = vtanh.pop %v2396
    %v2712 = vtanh.pop %v2454
    %v2713 = vtanh.pop %v2512
    %v2714 = vtanh.pop %v2570
    %v2715 = vtanh.pop %v2628
    %v2716 = vtanh.pop %v2686
    %v2717 = vtanh.pop %v2341
    %v2718 = vtanh.pop %v2399
    %v2719 = vtanh.pop %v2457
    %v2720 = vtanh.pop %v2515
    %v2721 = vtanh.pop %v2573
    %v2722 = vtanh.pop %v2631
    %v2723 = vtanh.pop %v2689
    %v2724 = vtanh.pop %v2343
    %v2725 = vtanh.pop %v2401
    %v2726 = vtanh.pop %v2459
    %v2727 = vtanh.pop %v2517
    %v2728 = vtanh.pop %v2575
    %v2729 = vtanh.pop %v2633
    %v2730 = vtanh.pop %v2691
    %v2731 = vtanh.pop %v2346
    %v2732 = vtanh.pop %v2404
    %v2733 = vtanh.pop %v2462
    %v2734 = vtanh.pop %v2520
    %v2735 = vtanh.pop %v2578
    %v2736 = vtanh.pop %v2636
    %v2737 = vtanh.pop %v2694
    %v2738 = vtanh.pop %v2348
    %v2739 = vtanh.pop %v2406
    %v2740 = vtanh.pop %v2464
    %v2741 = vtanh.pop %v2522
    %v2742 = vtanh.pop %v2580
    %v2743 = vtanh.pop %v2638
    %v2744 = vtanh.pop %v2696
    %v2745 = vtanh.pop %v2351
    %v2746 = vtanh.pop %v2409
    %v2747 = vtanh.pop %v2467
    %v2748 = vtanh.pop %v2525
    %v2749 = vtanh.pop %v2583
    %v2750 = vtanh.pop %v2641
    %v2751 = vtanh.pop %v2699
    %v2752 = vtanh.pop %v2353
    %v2753 = vtanh.pop %v2411
    %v2754 = vtanh.pop %v2469
    %v2755 = vtanh.pop %v2527
    %v2756 = vtanh.pop %v2585
    %v2757 = vtanh.pop %v2643
    %v2758 = vtanh.pop %v2701
    %v2759 = vpack.c.bf16 %v2704, %v2703
    %v2760 = vpack.c.bf16 %v2706, %v2705
    %v2761 = vpack.c.bf16 %v2708, %v2707
    %v2762 = vpack.c.bf16 %v2709, %v2709
    %v2763 = vpack.c.bf16 %v2711, %v2710
    %v2764 = vpack.c.bf16 %v2713, %v2712
    %v2765 = vpack.c.bf16 %v2715, %v2714
    %v2766 = vpack.c.bf16 %v2716, %v2716
    %v2767 = vpack.c.bf16 %v2718, %v2717
    %v2768 = vpack.c.bf16 %v2720, %v2719
    %v2769 = vpack.c.bf16 %v2722, %v2721
    %v2770 = vpack.c.bf16 %v2723, %v2723
    %v2771 = vpack.c.bf16 %v2725, %v2724
    %v2772 = vpack.c.bf16 %v2727, %v2726
    %v2773 = vpack.c.bf16 %v2729, %v2728
    %v2774 = vpack.c.bf16 %v2730, %v2730
    %v2775 = vpack.c.bf16 %v2732, %v2731
    %v2776 = vpack.c.bf16 %v2734, %v2733
    %v2777 = vpack.c.bf16 %v2736, %v2735
    %v2778 = vpack.c.bf16 %v2737, %v2737
    %v2779 = vpack.c.bf16 %v2739, %v2738
    %v2780 = vpack.c.bf16 %v2741, %v2740
    %v2781 = vpack.c.bf16 %v2743, %v2742
    %v2782 = vpack.c.bf16 %v2744, %v2744
    %v2783 = vpack.c.bf16 %v2746, %v2745
    %v2784 = vpack.c.bf16 %v2748, %v2747
    %v2785 = vpack.c.bf16 %v2750, %v2749
    %v2786 = vpack.c.bf16 %v2751, %v2751
    %v2787 = vpack.c.bf16 %v2753, %v2752
    %v2788 = vpack.c.bf16 %v2755, %v2754
    %v2789 = vpack.c.bf16 %v2757, %v2756
    %v2790 = vpack.c.bf16 %v2758, %v2758
    %2791 = vst [vmem:[#allocation13] sm:$0xff] %v2759
    %2792 = vst [vmem:[#allocation13 + $0x8] sm:$0xff] %v2760
    %2793 = vst [vmem:[#allocation13 + $0x10] sm:$0xff] %v2761
    %2794 = vst [vmem:[#allocation13 + $0x18] sm:$0xf] %v2762
    %2795 = vst [vmem:[#allocation13 + $0x1c] sm:$0xff] %v2763
    %2796 = vst [vmem:[#allocation13 + $0x24] sm:$0xff] %v2764
    %2797 = vst [vmem:[#allocation13 + $0x2c] sm:$0xff] %v2765
    %2798 = vst [vmem:[#allocation13 + $0x34] sm:$0xf] %v2766
    %2799 = vst [vmem:[#allocation13 + $0x38] sm:$0xff] %v2767
    %2800 = vst [vmem:[#allocation13 + $0x40] sm:$0xff] %v2768
    %2801 = vst [vmem:[#allocation13 + $0x48] sm:$0xff] %v2769
    %2802 = vst [vmem:[#allocation13 + $0x50] sm:$0xf] %v2770
    %2803 = vst [vmem:[#allocation13 + $0x54] sm:$0xff] %v2771
    %2804 = vst [vmem:[#allocation13 + $0x5c] sm:$0xff] %v2772
    %2805 = vst [vmem:[#allocation13 + $0x64] sm:$0xff] %v2773
    %2806 = vst [vmem:[#allocation13 + $0x6c] sm:$0xf] %v2774
    %2807 = vst [vmem:[#allocation13 + $0x70] sm:$0xff] %v2775
    %2808 = vst [vmem:[#allocation13 + $0x78] sm:$0xff] %v2776
    %2809 = vst [vmem:[#allocation13 + $0x80] sm:$0xff] %v2777
    %2810 = vst [vmem:[#allocation13 + $0x88] sm:$0xf] %v2778
    %2811 = vst [vmem:[#allocation13 + $0x8c] sm:$0xff] %v2779
    %2812 = vst [vmem:[#allocation13 + $0x94] sm:$0xff] %v2780
    %2813 = vst [vmem:[#allocation13 + $0x9c] sm:$0xff] %v2781
    %2814 = vst [vmem:[#allocation13 + $0xa4] sm:$0xf] %v2782
    %2815 = vst [vmem:[#allocation13 + $0xa8] sm:$0xff] %v2783
    %2816 = vst [vmem:[#allocation13 + $0xb0] sm:$0xff] %v2784
    %2817 = vst [vmem:[#allocation13 + $0xb8] sm:$0xff] %v2785
    %2818 = vst [vmem:[#allocation13 + $0xc0] sm:$0xf] %v2786
    %2819 = vst [vmem:[#allocation13 + $0xc4] sm:$0xff] %v2787
    %2820 = vst [vmem:[#allocation13 + $0xcc] sm:$0xff] %v2788
    %2821 = vst [vmem:[#allocation13 + $0xd4] sm:$0xff] %v2789
    %2822 = vst [vmem:[#allocation13 + $0xdc] sm:$0xf] %v2790
    // Predicated region
    $region54: #{generator_forward.1} parent=1 // pred_check
      _
    $region55: #{generator_forward.1} parent=1 // pred_check_branch
      %2824 = sbr.rel (0) target = $region57
    $region56: #{generator_forward.1} parent=1 // pred_region
      %2826 = vsyncadd [#allocation4], 0
      %s2827 = sshll.u32 [#allocation13], 4
      %s2828 = int_to_ptr.vmem [resolvable:$true] %s2827
      %s2829 = sshll.u32 %s7, 4
      %s2830 = int_to_ptr.hbm [resolvable:$true] %s2829
      %2835 = dma.vmem_to_hbm [thread:$0]  %s2828, 3584, %s2830, [#allocation4], 448, 448, 28
    $region57: #{generator_forward.1} parent=1 // pred_fallthru
      _
    // Predicated region
    $region58: #{generator_forward.1} parent=1 // pred_check
      _
    $region59: #{generator_forward.1} parent=1 // pred_check_branch
      %2837 = sbr.rel (0) target = $region61
    $region60: #{generator_forward.1} parent=1 // pred_region
      %2839 = dma.done [#allocation4], 3584
    $region61: #{generator_forward.1} parent=1 // pred_fallthru
      _
    %2840 = vsyncpa [#allocation3], 1
    %2841 = vsyncpa [#allocation6], 1
    %2842 = vsyncpa [#allocation9], 1
    %2843 = vsyncpa [#allocation12], 1
    %2844 = vsyncpa [#allocation4], 1

</llo_original>
